<compile_context>
chip_gen: v5e
topology: v5e:2x2
jax: 0.10.0
libtpu: 0.0.40
codegen_flags: <defaults>
</compile_context>

<pallas_src>
import functools
import math

import jax
import jax.numpy as jnp
from jax.experimental import pallas as pl
from jax.experimental.pallas import tpu as pltpu


# ------------------------------------------------------------- tiling utils -
def _pick_tile(dim, pref, align):
    """Largest tile <= pref that divides `dim` and is a multiple of `align`;
    falls back to the full dim (always legal: full-dim blocks bypass the
    (8,128) divisibility rule)."""
    if dim <= pref:
        return dim
    t = (pref // align) * align
    while t >= align:
        if dim % t == 0:
            return t
        t -= align
    return dim


# ---------------------------------------------------------------- linear ----
def _linear_kernel(x_ref, w_ref, b_ref, o_ref, acc_ref, *, activation):
    k = pl.program_id(2)

    @pl.when(k == 0)
    def _():
        acc_ref[...] = jnp.zeros_like(acc_ref)

    # y += x @ W^T  (PyTorch nn.Linear: W is (N, K)); contract last dims
    # directly via dot_general — no in-kernel transpose / XLU relayout.
    acc_ref[...] += jax.lax.dot_general(
        x_ref[...], w_ref[...],
        dimension_numbers=(((1,), (1,)), ((), ())),
        preferred_element_type=jnp.float32,
    )

    @pl.when(k == pl.num_programs(2) - 1)
    def _():
        y = acc_ref[...] + b_ref[...].astype(jnp.float32)
        if activation == "relu":
            y = jnp.maximum(y, 0.0)
        o_ref[...] = y.astype(o_ref.dtype)


def linear(x, w, b, activation=None, *, tm=256, tn=256, tk=512):
    """y = x @ W^T + b (+ optional ReLU). x:(M,K), w:(N,K), b:(N,) -> (M,N)."""
    M, K = x.shape
    N = w.shape[0]
    tm = _pick_tile(M, tm, 8)
    tn = _pick_tile(N, tn, 128)
    tk = _pick_tile(K, tk, 128)
    return pl.pallas_call(
        functools.partial(_linear_kernel, activation=activation),
        out_shape=jax.ShapeDtypeStruct((M, N), x.dtype),
        grid=(M // tm, N // tn, K // tk),
        in_specs=[
            pl.BlockSpec((tm, tk), lambda i, j, k: (i, k)),
            pl.BlockSpec((tn, tk), lambda i, j, k: (j, k)),
            pl.BlockSpec((1, tn), lambda i, j, k: (0, j)),
        ],
        out_specs=pl.BlockSpec((tm, tn), lambda i, j, k: (i, j)),
        scratch_shapes=[pltpu.VMEM((tm, tn), jnp.float32)],
        compiler_params=pltpu.CompilerParams(
            dimension_semantics=("parallel", "parallel", "arbitrary")),
    )(x, w, b.reshape(1, N))


# ------------------------------------- fused linear + residual + layernorm --
def _linear_add_ln_kernel(x_ref, w_ref, b_ref, r_ref, g_ref, bb_ref,
                          o_ref, acc_ref, *, eps):
    k = pl.program_id(1)

    @pl.when(k == 0)
    def _():
        acc_ref[...] = jnp.zeros_like(acc_ref)

    acc_ref[...] += jax.lax.dot_general(
        x_ref[...], w_ref[...],
        dimension_numbers=(((1,), (1,)), ((), ())),
        preferred_element_type=jnp.float32,
    )

    @pl.when(k == pl.num_programs(1) - 1)
    def _():
        h = (acc_ref[...] + b_ref[...].astype(jnp.float32)
             + r_ref[...].astype(jnp.float32))
        mean = jnp.mean(h, axis=-1, keepdims=True)
        var = jnp.mean(jnp.square(h - mean), axis=-1, keepdims=True)
        y = (h - mean) * jax.lax.rsqrt(var + eps)
        o_ref[...] = (y * g_ref[...].astype(jnp.float32)
                      + bb_ref[...].astype(jnp.float32)).astype(o_ref.dtype)


def linear_add_layernorm(x, w, b, resid, gamma, beta, *, eps=1e-5, tm=256, tk=512):
    """LayerNorm(resid + x @ W^T + b); N = d_model kept whole (full LN row)."""
    M, K = x.shape
    N = w.shape[0]
    tm = _pick_tile(M, tm, 8)
    tk = _pick_tile(K, tk, 128)
    return pl.pallas_call(
        functools.partial(_linear_add_ln_kernel, eps=eps),
        out_shape=jax.ShapeDtypeStruct((M, N), x.dtype),
        grid=(M // tm, K // tk),
        in_specs=[
            pl.BlockSpec((tm, tk), lambda i, k: (i, k)),
            pl.BlockSpec((N, tk), lambda i, k: (0, k)),
            pl.BlockSpec((1, N), lambda i, k: (0, 0)),
            pl.BlockSpec((tm, N), lambda i, k: (i, 0)),
            pl.BlockSpec((1, N), lambda i, k: (0, 0)),
            pl.BlockSpec((1, N), lambda i, k: (0, 0)),
        ],
        out_specs=pl.BlockSpec((tm, N), lambda i, k: (i, 0)),
        scratch_shapes=[pltpu.VMEM((tm, N), jnp.float32)],
        compiler_params=pltpu.CompilerParams(
            dimension_semantics=("parallel", "arbitrary")),
    )(x, w, b.reshape(1, N), resid, gamma.reshape(1, N), beta.reshape(1, N))


# ------------------------------------------------------------- attention ----
def _attn_kernel(q_ref, k_ref, v_ref, o_ref, *, nhead):
    # Block is (S, 1, H, Dh): all heads of one batch element. The 1/sqrt(Dh)
    # scale is already folded into the Q projection weights.
    # TODO(synk): flash-style KV tiling (online softmax with m/l/acc scratch)
    # for long sequences where the full (S, S) score block would not fit VMEM.
    for h in range(nhead):
        q = q_ref[:, 0, h, :]                          # (S, Dh)
        k = k_ref[:, 0, h, :]
        v = v_ref[:, 0, h, :]
        s = jax.lax.dot_general(                       # q @ k^T without a .T op
            q, k, dimension_numbers=(((1,), (1,)), ((), ())),
            preferred_element_type=jnp.float32)        # (S, S)
        m = jnp.max(s, axis=-1, keepdims=True)
        p = jnp.exp(s - m)
        inv = pl.reciprocal(jnp.sum(p, axis=-1, keepdims=True), approx=True)
        p = (p * inv).astype(v.dtype)
        o = jnp.dot(p, v, preferred_element_type=jnp.float32)
        o_ref[:, 0, h, :] = o.astype(o_ref.dtype)


def attention(q, k, v):
    # q, k, v: (S, B, H, Dh) — a pure reshape of the QKV projection output,
    # no host-side transposes. One grid step per batch element.
    S, B, H, Dh = q.shape
    spec = pl.BlockSpec((S, 1, H, Dh), lambda b: (0, b, 0, 0))
    return pl.pallas_call(
        functools.partial(_attn_kernel, nhead=H),
        out_shape=jax.ShapeDtypeStruct((S, B, H, Dh), q.dtype),
        grid=(B,),
        in_specs=[spec, spec, spec],
        out_specs=spec,
        compiler_params=pltpu.CompilerParams(dimension_semantics=("parallel",)),
    )(q, k, v)


# -------------------------------------------------------------- parameters --
def init_params(key, d_model, dim_feedforward):
    E = d_model
    ks = jax.random.split(key, 8)

    def u(k, shape, fan_in):
        bound = 1.0 / math.sqrt(fan_in)
        return jax.random.uniform(k, shape, jnp.float32, -bound, bound)

    return dict(
        in_proj_w=u(ks[0], (3 * E, E), E),
        in_proj_b=u(ks[1], (3 * E,), E),
        out_proj_w=u(ks[2], (E, E), E),
        out_proj_b=jnp.zeros((E,), jnp.float32),  # PyTorch MHA inits out_proj bias to 0
        linear1_w=u(ks[3], (dim_feedforward, E), E),
        linear1_b=u(ks[4], (dim_feedforward,), E),
        linear2_w=u(ks[5], (E, dim_feedforward), dim_feedforward),
        linear2_b=u(ks[6], (E,), dim_feedforward),
        norm1_g=jnp.ones((E,), jnp.float32),
        norm1_b=jnp.zeros((E,), jnp.float32),
        norm2_g=jnp.ones((E,), jnp.float32),
        norm2_b=jnp.zeros((E,), jnp.float32),
    )


# ------------------------------------------------------------- full layer ---
def transformer_encoder_layer(src, params, nhead):
    S, B, E = src.shape
    assert E % nhead == 0
    head_dim = E // nhead
    scale = 1.0 / math.sqrt(head_dim)

    x = src.reshape(S * B, E)

    # Fold the softmax 1/sqrt(Dh) scale into the Q rows of in_proj (tiny host op,
    # removes a per-head VALU multiply over (S, Dh) inside the attention kernel).
    in_w = params["in_proj_w"].at[:E].multiply(scale)
    in_b = params["in_proj_b"].at[:E].multiply(scale)

    # --- self-attention (qkv same embed dim; kdim=vdim=None) ---
    qkv = linear(x, in_w, in_b)                 # (S*B, 3E)
    q, k, v = jnp.split(qkv, 3, axis=-1)

    def heads(t):
        # (S*B, E) -> (S, B, H, Dh): pure reshape, no transpose / HBM copy.
        return t.reshape(S, B, nhead, head_dim)

    attn = attention(heads(q), heads(k), heads(v))          # (S, B, H, Dh)
    attn = attn.reshape(S * B, E)

    # --- out_proj + residual + norm1 (fused epilogue) ---
    h = linear_add_layernorm(attn, params["out_proj_w"], params["out_proj_b"],
                             x, params["norm1_g"], params["norm1_b"])

    # --- feed-forward: linear1+ReLU, then linear2 + residual + norm2 (fused) ---
    ff = linear(h, params["linear1_w"], params["linear1_b"], activation="relu")
    out = linear_add_layernorm(ff, params["linear2_w"], params["linear2_b"],
                               h, params["norm2_g"], params["norm2_b"])
    return out.reshape(S, B, E)


# ---------------------------------------------------------- pure-JAX ref ----
def reference(src, params, nhead):
    S, B, E = src.shape
    Dh = E // nhead
    x = src.reshape(S * B, E)
    qkv = x @ params["in_proj_w"].T + params["in_proj_b"]
    q, k, v = jnp.split(qkv, 3, axis=-1)
    rs = lambda t: t.reshape(S, B * nhead, Dh).transpose(1, 0, 2)
    q, k, v = rs(q), rs(k), rs(v)
    s = jnp.einsum("bqd,bkd->bqk", q / math.sqrt(Dh), k)
    p = jax.nn.softmax(s, axis=-1)
    a = jnp.einsum("bqk,bkd->bqd", p, v).transpose(1, 0, 2).reshape(S * B, E)
    src2 = a @ params["out_proj_w"].T + params["out_proj_b"]

    def ln(t, g, b):
        m = t.mean(-1, keepdims=True)
        vv = ((t - m) ** 2).mean(-1, keepdims=True)
        return (t - m) * jax.lax.rsqrt(vv + 1e-5) * g + b

    h = ln(x + src2, params["norm1_g"], params["norm1_b"])
    ff = jnp.maximum(h @ params["linear1_w"].T + params["linear1_b"], 0.0)
    src2 = ff @ params["linear2_w"].T + params["linear2_b"]
    return ln(h + src2, params["norm2_g"], params["norm2_b"]).reshape(S, B, E)


if __name__ == "__main__":
    S, B, E, H, FF = 8, 2, 32, 4, 64
    key = jax.random.PRNGKey(0)
    k_src, k_par = jax.random.split(key)
    src = jax.random.normal(k_src, (S, B, E), jnp.float32)
    params = init_params(k_par, E, FF)

    layer = jax.jit(functools.partial(transformer_encoder_layer, nhead=H))
    out = jax.block_until_ready(layer(src, params))

    ref = reference(src, params, H)
    assert out.shape == (S, B, E)
    assert jnp.allclose(out, ref, atol=2e-3, rtol=2e-3)
    print("KERNEL_OK")
</pallas_src>

<mosaic_0001>
module attributes {stable_mosaic.version = 11 : i64} {
  func.func @_linear_kernel(%arg0: i32, %arg1: i32, %arg2: i32, %arg3: memref<16x32xf32, #tpu.memory_space<vmem>>, %arg4: memref<96x32xf32, #tpu.memory_space<vmem>>, %arg5: memref<1x96xf32, #tpu.memory_space<vmem>>, %arg6: memref<16x96xf32, #tpu.memory_space<vmem>>, %arg7: memref<16x96xf32, #tpu.memory_space<vmem>>) attributes {dimension_semantics = [#tpu.dimension_semantics<parallel>, #tpu.dimension_semantics<parallel>, #tpu.dimension_semantics<arbitrary>], iteration_bounds = array<i64: 1, 1, 1>, scalar_prefetch = 0 : i64, scratch_operands = 1 : i64, tpu.core_type = #tpu.core_type<tc>, window_params = [{transform_indices = @transform_0, window_bounds = array<i64: 16, 32>}, {transform_indices = @transform_1, window_bounds = array<i64: 96, 32>}, {transform_indices = @transform_2, window_bounds = array<i64: 1, 96>}, {transform_indices = @transform_3, window_bounds = array<i64: 16, 96>}]} {
    %c0_i32 = arith.constant 0 : i32
    %0 = arith.cmpi eq, %arg2, %c0_i32 : i32
    %1 = arith.extui %0 : i1 to i32
    %c0_i32_0 = arith.constant 0 : i32
    %2 = arith.cmpi ne, %1, %c0_i32_0 : i32
    scf.if %2 {
      %cst_10 = arith.constant 0.000000e+00 : f32
      %12 = vector.broadcast %cst_10 : f32 to vector<16x96xf32>
      %c0_11 = arith.constant 0 : index
      %c0_12 = arith.constant 0 : index
      %13 = vector.load %arg7[%c0_11, %c0_12] : memref<16x96xf32, #tpu.memory_space<vmem>>, vector<16x96xf32>
      tpu.vector_store %arg7[%c0_11, %c0_12], %12 {strides = array<i32>} : memref<16x96xf32, #tpu.memory_space<vmem>>, vector<16x96xf32>,
    } else {
    }
    %c0 = arith.constant 0 : index
    %c0_1 = arith.constant 0 : index
    %3 = vector.load %arg7[%c0, %c0_1] : memref<16x96xf32, #tpu.memory_space<vmem>>, vector<16x96xf32>
    %c0_2 = arith.constant 0 : index
    %c0_3 = arith.constant 0 : index
    %4 = vector.load %arg3[%c0_2, %c0_3] : memref<16x32xf32, #tpu.memory_space<vmem>>, vector<16x32xf32>
    %c0_4 = arith.constant 0 : index
    %c0_5 = arith.constant 0 : index
    %5 = vector.load %arg4[%c0_4, %c0_5] : memref<96x32xf32, #tpu.memory_space<vmem>>, vector<96x32xf32>
    %cst = arith.constant dense<0.000000e+00> : vector<16x96xf32>
    %6 = tpu.matmul %4, %5, %cst {dimension_numbers = #tpu.dot_dimension_numbers<[1], [1], [0], [0], [0, 0, 1, 0], [], []>} : vector<16x32xf32>, vector<96x32xf32>, vector<16x96xf32> -> vector<16x96xf32>
    %7 = arith.addf %3, %6 : vector<16x96xf32>
    %c0_6 = arith.constant 0 : index
    %c0_7 = arith.constant 0 : index
    %8 = vector.load %arg7[%c0_6, %c0_7] : memref<16x96xf32, #tpu.memory_space<vmem>>, vector<16x96xf32>
    tpu.vector_store %arg7[%c0_6, %c0_7], %7 {strides = array<i32>} : memref<16x96xf32, #tpu.memory_space<vmem>>, vector<16x96xf32>,
    %c0_i32_8 = arith.constant 0 : i32
    %9 = arith.cmpi eq, %arg2, %c0_i32_8 : i32
    %10 = arith.extui %9 : i1 to i32
    %c0_i32_9 = arith.constant 0 : i32
    %11 = arith.cmpi ne, %10, %c0_i32_9 : i32
    scf.if %11 {
      %c0_10 = arith.constant 0 : index
      %c0_11 = arith.constant 0 : index
      %12 = vector.load %arg7[%c0_10, %c0_11] : memref<16x96xf32, #tpu.memory_space<vmem>>, vector<16x96xf32>
      %c0_12 = arith.constant 0 : index
      %c0_13 = arith.constant 0 : index
      %13 = vector.load %arg5[%c0_12, %c0_13] : memref<1x96xf32, #tpu.memory_space<vmem>>, vector<1x96xf32>
      %14 = vector.broadcast %13 : vector<1x96xf32> to vector<16x96xf32>
      %15 = arith.addf %12, %14 : vector<16x96xf32>
      %c0_14 = arith.constant 0 : index
      %c0_15 = arith.constant 0 : index
      %16 = vector.load %arg6[%c0_14, %c0_15] : memref<16x96xf32, #tpu.memory_space<vmem>>, vector<16x96xf32>
      tpu.vector_store %arg6[%c0_14, %c0_15], %15 {strides = array<i32>} : memref<16x96xf32, #tpu.memory_space<vmem>>, vector<16x96xf32>,
    } else {
    }
    return
  }
  func.func @transform_0(%arg0: i32, %arg1: i32, %arg2: i32) -> (i32, i32) {
    %c0_i32 = arith.constant 0 : i32
    return %arg0, %arg2 : i32, i32
  }
  func.func @transform_1(%arg0: i32, %arg1: i32, %arg2: i32) -> (i32, i32) {
    %c0_i32 = arith.constant 0 : i32
    return %arg1, %arg2 : i32, i32
  }
  func.func @transform_2(%arg0: i32, %arg1: i32, %arg2: i32) -> (i32, i32) {
    %c0_i32 = arith.constant 0 : i32
    %c0_i32_0 = arith.constant 0 : i32
    return %c0_i32, %arg1 : i32, i32
  }
  func.func @transform_3(%arg0: i32, %arg1: i32, %arg2: i32) -> (i32, i32) {
    %c0_i32 = arith.constant 0 : i32
    return %arg0, %arg1 : i32, i32
  }
}

module attributes {stable_mosaic.version = 11 : i64} {
  func.func @_attn_kernel(%arg0: i32, %arg1: memref<8x1x4x8xf32, #tpu.memory_space<vmem>>, %arg2: memref<8x1x4x8xf32, #tpu.memory_space<vmem>>, %arg3: memref<8x1x4x8xf32, #tpu.memory_space<vmem>>, %arg4: memref<8x1x4x8xf32, #tpu.memory_space<vmem>>) attributes {dimension_semantics = [#tpu.dimension_semantics<parallel>], iteration_bounds = array<i64: 2>, scalar_prefetch = 0 : i64, scratch_operands = 0 : i64, tpu.core_type = #tpu.core_type<tc>, window_params = [{transform_indices = @transform_0, window_bounds = array<i64: 8, 1, 4, 8>}, {transform_indices = @transform_1, window_bounds = array<i64: 8, 1, 4, 8>}, {transform_indices = @transform_2, window_bounds = array<i64: 8, 1, 4, 8>}, {transform_indices = @transform_3, window_bounds = array<i64: 8, 1, 4, 8>}]} {
    %c0 = arith.constant 0 : index
    %c0_0 = arith.constant 0 : index
    %c0_1 = arith.constant 0 : index
    %c0_2 = arith.constant 0 : index
    %0 = vector.load %arg1[%c0, %c0_0, %c0_1, %c0_2] : memref<8x1x4x8xf32, #tpu.memory_space<vmem>>, vector<8x1x1x8xf32>
    %1 = vector.shape_cast %0 : vector<8x1x1x8xf32> to vector<8x8xf32>
    %c0_3 = arith.constant 0 : index
    %c0_4 = arith.constant 0 : index
    %c0_5 = arith.constant 0 : index
    %c0_6 = arith.constant 0 : index
    %2 = vector.load %arg2[%c0_3, %c0_4, %c0_5, %c0_6] : memref<8x1x4x8xf32, #tpu.memory_space<vmem>>, vector<8x1x1x8xf32>
    %3 = vector.shape_cast %2 : vector<8x1x1x8xf32> to vector<8x8xf32>
    %c0_7 = arith.constant 0 : index
    %c0_8 = arith.constant 0 : index
    %c0_9 = arith.constant 0 : index
    %c0_10 = arith.constant 0 : index
    %4 = vector.load %arg3[%c0_7, %c0_8, %c0_9, %c0_10] : memref<8x1x4x8xf32, #tpu.memory_space<vmem>>, vector<8x1x1x8xf32>
    %5 = vector.shape_cast %4 : vector<8x1x1x8xf32> to vector<8x8xf32>
    %cst = arith.constant dense<0.000000e+00> : vector<8x8xf32>
    %6 = tpu.matmul %1, %3, %cst {dimension_numbers = #tpu.dot_dimension_numbers<[1], [1], [0], [0], [0, 0, 1, 0], [], []>} : vector<8x8xf32>, vector<8x8xf32>, vector<8x8xf32> -> vector<8x8xf32>
    %cst_11 = arith.constant dense<0xFF800000> : vector<8xf32>
    %7 = vector.multi_reduction <maximumf>, %6, %cst_11 [1] : vector<8x8xf32> to vector<8xf32>
    %8 = vector.shape_cast %7 : vector<8xf32> to vector<8x1xf32>
    %9 = vector.broadcast %8 : vector<8x1xf32> to vector<8x8xf32>
    %10 = arith.subf %6, %9 : vector<8x8xf32>
    %11 = math.exp %10 : vector<8x8xf32>
    %cst_12 = arith.constant dense<0.000000e+00> : vector<8xf32>
    %12 = vector.multi_reduction <add>, %11, %cst_12 [1] : vector<8x8xf32> to vector<8xf32>
    %13 = vector.shape_cast %12 : vector<8xf32> to vector<8x1xf32>
    %14 = tpu.reciprocal %13 {approx = true} : vector<8x1xf32> -> vector<8x1xf32>
    %15 = vector.broadcast %14 : vector<8x1xf32> to vector<8x8xf32>
    %16 = arith.mulf %11, %15 : vector<8x8xf32>
    %cst_13 = arith.constant dense<0.000000e+00> : vector<8x8xf32>
    %17 = tpu.matmul %16, %5, %cst_13 {dimension_numbers = #tpu.dot_dimension_numbers<[1], [0], [0], [1], [0, 0, 1, 1], [], []>} : vector<8x8xf32>, vector<8x8xf32>, vector<8x8xf32> -> vector<8x8xf32>
    %c0_14 = arith.constant 0 : index
    %c0_15 = arith.constant 0 : index
    %c0_16 = arith.constant 0 : index
    %c0_17 = arith.constant 0 : index
    %18 = vector.load %arg4[%c0_14, %c0_15, %c0_16, %c0_17] : memref<8x1x4x8xf32, #tpu.memory_space<vmem>>, vector<8x1x1x8xf32>
    %19 = vector.shape_cast %18 : vector<8x1x1x8xf32> to vector<8x8xf32>
    %20 = vector.shape_cast %17 : vector<8x8xf32> to vector<8x1x1x8xf32>
    tpu.vector_store %arg4[%c0_14, %c0_15, %c0_16, %c0_17], %20 {strides = array<i32>} : memref<8x1x4x8xf32, #tpu.memory_space<vmem>>, vector<8x1x1x8xf32>,
    %c0_18 = arith.constant 0 : index
    %c0_19 = arith.constant 0 : index
    %c1 = arith.constant 1 : index
    %c0_20 = arith.constant 0 : index
    %21 = vector.load %arg1[%c0_18, %c0_19, %c1, %c0_20] : memref<8x1x4x8xf32, #tpu.memory_space<vmem>>, vector<8x1x1x8xf32>
    %22 = vector.shape_cast %21 : vector<8x1x1x8xf32> to vector<8x8xf32>
    %c0_21 = arith.constant 0 : index
    %c0_22 = arith.constant 0 : index
    %c1_23 = arith.constant 1 : index
    %c0_24 = arith.constant 0 : index
    %23 = vector.load %arg2[%c0_21, %c0_22, %c1_23, %c0_24] : memref<8x1x4x8xf32, #tpu.memory_space<vmem>>, vector<8x1x1x8xf32>
    %24 = vector.shape_cast %23 : vector<8x1x1x8xf32> to vector<8x8xf32>
    %c0_25 = arith.constant 0 : index
    %c0_26 = arith.constant 0 : index
    %c1_27 = arith.constant 1 : index
    %c0_28 = arith.constant 0 : index
    %25 = vector.load %arg3[%c0_25, %c0_26, %c1_27, %c0_28] : memref<8x1x4x8xf32, #tpu.memory_space<vmem>>, vector<8x1x1x8xf32>
    %26 = vector.shape_cast %25 : vector<8x1x1x8xf32> to vector<8x8xf32>
    %cst_29 = arith.constant dense<0.000000e+00> : vector<8x8xf32>
    %27 = tpu.matmul %22, %24, %cst_29 {dimension_numbers = #tpu.dot_dimension_numbers<[1], [1], [0], [0], [0, 0, 1, 0], [], []>} : vector<8x8xf32>, vector<8x8xf32>, vector<8x8xf32> -> vector<8x8xf32>
    %cst_30 = arith.constant dense<0xFF800000> : vector<8xf32>
    %28 = vector.multi_reduction <maximumf>, %27, %cst_30 [1] : vector<8x8xf32> to vector<8xf32>
    %29 = vector.shape_cast %28 : vector<8xf32> to vector<8x1xf32>
    %30 = vector.broadcast %29 : vector<8x1xf32> to vector<8x8xf32>
    %31 = arith.subf %27, %30 : vector<8x8xf32>
    %32 = math.exp %31 : vector<8x8xf32>
    %cst_31 = arith.constant dense<0.000000e+00> : vector<8xf32>
    %33 = vector.multi_reduction <add>, %32, %cst_31 [1] : vector<8x8xf32> to vector<8xf32>
    %34 = vector.shape_cast %33 : vector<8xf32> to vector<8x1xf32>
    %35 = tpu.reciprocal %34 {approx = true} : vector<8x1xf32> -> vector<8x1xf32>
    %36 = vector.broadcast %35 : vector<8x1xf32> to vector<8x8xf32>
    %37 = arith.mulf %32, %36 : vector<8x8xf32>
    %cst_32 = arith.constant dense<0.000000e+00> : vector<8x8xf32>
    %38 = tpu.matmul %37, %26, %cst_32 {dimension_numbers = #tpu.dot_dimension_numbers<[1], [0], [0], [1], [0, 0, 1, 1], [], []>} : vector<8x8xf32>, vector<8x8xf32>, vector<8x8xf32> -> vector<8x8xf32>
    %c0_33 = arith.constant 0 : index
    %c0_34 = arith.constant 0 : index
    %c1_35 = arith.constant 1 : index
    %c0_36 = arith.constant 0 : index
    %39 = vector.load %arg4[%c0_33, %c0_34, %c1_35, %c0_36] : memref<8x1x4x8xf32, #tpu.memory_space<vmem>>, vector<8x1x1x8xf32>
    %40 = vector.shape_cast %39 : vector<8x1x1x8xf32> to vector<8x8xf32>
    %41 = vector.shape_cast %38 : vector<8x8xf32> to vector<8x1x1x8xf32>
    tpu.vector_store %arg4[%c0_33, %c0_34, %c1_35, %c0_36], %41 {strides = array<i32>} : memref<8x1x4x8xf32, #tpu.memory_space<vmem>>, vector<8x1x1x8xf32>,
    %c0_37 = arith.constant 0 : index
    %c0_38 = arith.constant 0 : index
    %c2 = arith.constant 2 : index
    %c0_39 = arith.constant 0 : index
    %42 = vector.load %arg1[%c0_37, %c0_38, %c2, %c0_39] : memref<8x1x4x8xf32, #tpu.memory_space<vmem>>, vector<8x1x1x8xf32>
    %43 = vector.shape_cast %42 : vector<8x1x1x8xf32> to vector<8x8xf32>
    %c0_40 = arith.constant 0 : index
    %c0_41 = arith.constant 0 : index
    %c2_42 = arith.constant 2 : index
    %c0_43 = arith.constant 0 : index
    %44 = vector.load %arg2[%c0_40, %c0_41, %c2_42, %c0_43] : memref<8x1x4x8xf32, #tpu.memory_space<vmem>>, vector<8x1x1x8xf32>
    %45 = vector.shape_cast %44 : vector<8x1x1x8xf32> to vector<8x8xf32>
    %c0_44 = arith.constant 0 : index
    %c0_45 = arith.constant 0 : index
    %c2_46 = arith.constant 2 : index
    %c0_47 = arith.constant 0 : index
    %46 = vector.load %arg3[%c0_44, %c0_45, %c2_46, %c0_47] : memref<8x1x4x8xf32, #tpu.memory_space<vmem>>, vector<8x1x1x8xf32>
    %47 = vector.shape_cast %46 : vector<8x1x1x8xf32> to vector<8x8xf32>
    %cst_48 = arith.constant dense<0.000000e+00> : vector<8x8xf32>
    %48 = tpu.matmul %43, %45, %cst_48 {dimension_numbers = #tpu.dot_dimension_numbers<[1], [1], [0], [0], [0, 0, 1, 0], [], []>} : vector<8x8xf32>, vector<8x8xf32>, vector<8x8xf32> -> vector<8x8xf32>
    %cst_49 = arith.constant dense<0xFF800000> : vector<8xf32>
    %49 = vector.multi_reduction <maximumf>, %48, %cst_49 [1] : vector<8x8xf32> to vector<8xf32>
    %50 = vector.shape_cast %49 : vector<8xf32> to vector<8x1xf32>
    %51 = vector.broadcast %50 : vector<8x1xf32> to vector<8x8xf32>
    %52 = arith.subf %48, %51 : vector<8x8xf32>
    %53 = math.exp %52 : vector<8x8xf32>
    %cst_50 = arith.constant dense<0.000000e+00> : vector<8xf32>
    %54 = vector.multi_reduction <add>, %53, %cst_50 [1] : vector<8x8xf32> to vector<8xf32>
    %55 = vector.shape_cast %54 : vector<8xf32> to vector<8x1xf32>
    %56 = tpu.reciprocal %55 {approx = true} : vector<8x1xf32> -> vector<8x1xf32>
    %57 = vector.broadcast %56 : vector<8x1xf32> to vector<8x8xf32>
    %58 = arith.mulf %53, %57 : vector<8x8xf32>
    %cst_51 = arith.constant dense<0.000000e+00> : vector<8x8xf32>
    %59 = tpu.matmul %58, %47, %cst_51 {dimension_numbers = #tpu.dot_dimension_numbers<[1], [0], [0], [1], [0, 0, 1, 1], [], []>} : vector<8x8xf32>, vector<8x8xf32>, vector<8x8xf32> -> vector<8x8xf32>
    %c0_52 = arith.constant 0 : index
    %c0_53 = arith.constant 0 : index
    %c2_54 = arith.constant 2 : index
    %c0_55 = arith.constant 0 : index
    %60 = vector.load %arg4[%c0_52, %c0_53, %c2_54, %c0_55] : memref<8x1x4x8xf32, #tpu.memory_space<vmem>>, vector<8x1x1x8xf32>
    %61 = vector.shape_cast %60 : vector<8x1x1x8xf32> to vector<8x8xf32>
    %62 = vector.shape_cast %59 : vector<8x8xf32> to vector<8x1x1x8xf32>
    tpu.vector_store %arg4[%c0_52, %c0_53, %c2_54, %c0_55], %62 {strides = array<i32>} : memref<8x1x4x8xf32, #tpu.memory_space<vmem>>, vector<8x1x1x8xf32>,
    %c0_56 = arith.constant 0 : index
    %c0_57 = arith.constant 0 : index
    %c3 = arith.constant 3 : index
    %c0_58 = arith.constant 0 : index
    %63 = vector.load %arg1[%c0_56, %c0_57, %c3, %c0_58] : memref<8x1x4x8xf32, #tpu.memory_space<vmem>>, vector<8x1x1x8xf32>
    %64 = vector.shape_cast %63 : vector<8x1x1x8xf32> to vector<8x8xf32>
    %c0_59 = arith.constant 0 : index
    %c0_60 = arith.constant 0 : index
    %c3_61 = arith.constant 3 : index
    %c0_62 = arith.constant 0 : index
    %65 = vector.load %arg2[%c0_59, %c0_60, %c3_61, %c0_62] : memref<8x1x4x8xf32, #tpu.memory_space<vmem>>, vector<8x1x1x8xf32>
    %66 = vector.shape_cast %65 : vector<8x1x1x8xf32> to vector<8x8xf32>
    %c0_63 = arith.constant 0 : index
    %c0_64 = arith.constant 0 : index
    %c3_65 = arith.constant 3 : index
    %c0_66 = arith.constant 0 : index
    %67 = vector.load %arg3[%c0_63, %c0_64, %c3_65, %c0_66] : memref<8x1x4x8xf32, #tpu.memory_space<vmem>>, vector<8x1x1x8xf32>
    %68 = vector.shape_cast %67 : vector<8x1x1x8xf32> to vector<8x8xf32>
    %cst_67 = arith.constant dense<0.000000e+00> : vector<8x8xf32>
    %69 = tpu.matmul %64, %66, %cst_67 {dimension_numbers = #tpu.dot_dimension_numbers<[1], [1], [0], [0], [0, 0, 1, 0], [], []>} : vector<8x8xf32>, vector<8x8xf32>, vector<8x8xf32> -> vector<8x8xf32>
    %cst_68 = arith.constant dense<0xFF800000> : vector<8xf32>
    %70 = vector.multi_reduction <maximumf>, %69, %cst_68 [1] : vector<8x8xf32> to vector<8xf32>
    %71 = vector.shape_cast %70 : vector<8xf32> to vector<8x1xf32>
    %72 = vector.broadcast %71 : vector<8x1xf32> to vector<8x8xf32>
    %73 = arith.subf %69, %72 : vector<8x8xf32>
    %74 = math.exp %73 : vector<8x8xf32>
    %cst_69 = arith.constant dense<0.000000e+00> : vector<8xf32>
    %75 = vector.multi_reduction <add>, %74, %cst_69 [1] : vector<8x8xf32> to vector<8xf32>
    %76 = vector.shape_cast %75 : vector<8xf32> to vector<8x1xf32>
    %77 = tpu.reciprocal %76 {approx = true} : vector<8x1xf32> -> vector<8x1xf32>
    %78 = vector.broadcast %77 : vector<8x1xf32> to vector<8x8xf32>
    %79 = arith.mulf %74, %78 : vector<8x8xf32>
    %cst_70 = arith.constant dense<0.000000e+00> : vector<8x8xf32>
    %80 = tpu.matmul %79, %68, %cst_70 {dimension_numbers = #tpu.dot_dimension_numbers<[1], [0], [0], [1], [0, 0, 1, 1], [], []>} : vector<8x8xf32>, vector<8x8xf32>, vector<8x8xf32> -> vector<8x8xf32>
    %c0_71 = arith.constant 0 : index
    %c0_72 = arith.constant 0 : index
    %c3_73 = arith.constant 3 : index
    %c0_74 = arith.constant 0 : index
    %81 = vector.load %arg4[%c0_71, %c0_72, %c3_73, %c0_74] : memref<8x1x4x8xf32, #tpu.memory_space<vmem>>, vector<8x1x1x8xf32>
    %82 = vector.shape_cast %81 : vector<8x1x1x8xf32> to vector<8x8xf32>
    %83 = vector.shape_cast %80 : vector<8x8xf32> to vector<8x1x1x8xf32>
    tpu.vector_store %arg4[%c0_71, %c0_72, %c3_73, %c0_74], %83 {strides = array<i32>} : memref<8x1x4x8xf32, #tpu.memory_space<vmem>>, vector<8x1x1x8xf32>,
    return
  }
  func.func @transform_0(%arg0: i32) -> (i32, i32, i32, i32) {
    %c0_i32 = arith.constant 0 : i32
    %c0_i32_0 = arith.constant 0 : i32
    %c0_i32_1 = arith.constant 0 : i32
    %c0_i32_2 = arith.constant 0 : i32
    return %c0_i32, %arg0, %c0_i32_0, %c0_i32_1 : i32, i32, i32, i32
  }
  func.func @transform_1(%arg0: i32) -> (i32, i32, i32, i32) {
    %c0_i32 = arith.constant 0 : i32
    %c0_i32_0 = arith.constant 0 : i32
    %c0_i32_1 = arith.constant 0 : i32
    %c0_i32_2 = arith.constant 0 : i32
    return %c0_i32, %arg0, %c0_i32_0, %c0_i32_1 : i32, i32, i32, i32
  }
  func.func @transform_2(%arg0: i32) -> (i32, i32, i32, i32) {
    %c0_i32 = arith.constant 0 : i32
    %c0_i32_0 = arith.constant 0 : i32
    %c0_i32_1 = arith.constant 0 : i32
    %c0_i32_2 = arith.constant 0 : i32
    return %c0_i32, %arg0, %c0_i32_0, %c0_i32_1 : i32, i32, i32, i32
  }
  func.func @transform_3(%arg0: i32) -> (i32, i32, i32, i32) {
    %c0_i32 = arith.constant 0 : i32
    %c0_i32_0 = arith.constant 0 : i32
    %c0_i32_1 = arith.constant 0 : i32
    %c0_i32_2 = arith.constant 0 : i32
    return %c0_i32, %arg0, %c0_i32_0, %c0_i32_1 : i32, i32, i32, i32
  }
}

module attributes {stable_mosaic.version = 11 : i64} {
  func.func @_linear_add_ln_kernel(%arg0: i32, %arg1: i32, %arg2: memref<16x32xf32, #tpu.memory_space<vmem>>, %arg3: memref<32x32xf32, #tpu.memory_space<vmem>>, %arg4: memref<1x32xf32, #tpu.memory_space<vmem>>, %arg5: memref<16x32xf32, #tpu.memory_space<vmem>>, %arg6: memref<1x32xf32, #tpu.memory_space<vmem>>, %arg7: memref<1x32xf32, #tpu.memory_space<vmem>>, %arg8: memref<16x32xf32, #tpu.memory_space<vmem>>, %arg9: memref<16x32xf32, #tpu.memory_space<vmem>>) attributes {dimension_semantics = [#tpu.dimension_semantics<parallel>, #tpu.dimension_semantics<arbitrary>], iteration_bounds = array<i64: 1, 1>, scalar_prefetch = 0 : i64, scratch_operands = 1 : i64, tpu.core_type = #tpu.core_type<tc>, window_params = [{transform_indices = @transform_0, window_bounds = array<i64: 16, 32>}, {transform_indices = @transform_1, window_bounds = array<i64: 32, 32>}, {pipeline_mode = #tpu.pipeline_mode<synchronous>, transform_indices = @transform_2, window_bounds = array<i64: 1, 32>}, {transform_indices = @transform_3, window_bounds = array<i64: 16, 32>}, {pipeline_mode = #tpu.pipeline_mode<synchronous>, transform_indices = @transform_4, window_bounds = array<i64: 1, 32>}, {pipeline_mode = #tpu.pipeline_mode<synchronous>, transform_indices = @transform_5, window_bounds = array<i64: 1, 32>}, {transform_indices = @transform_6, window_bounds = array<i64: 16, 32>}]} {
    %c0_i32 = arith.constant 0 : i32
    %0 = arith.cmpi eq, %arg1, %c0_i32 : i32
    %1 = arith.extui %0 : i1 to i32
    %c0_i32_0 = arith.constant 0 : i32
    %2 = arith.cmpi ne, %1, %c0_i32_0 : i32
    scf.if %2 {
      %cst_10 = arith.constant 0.000000e+00 : f32
      %12 = vector.broadcast %cst_10 : f32 to vector<16x32xf32>
      %c0_11 = arith.constant 0 : index
      %c0_12 = arith.constant 0 : index
      %13 = vector.load %arg9[%c0_11, %c0_12] : memref<16x32xf32, #tpu.memory_space<vmem>>, vector<16x32xf32>
      tpu.vector_store %arg9[%c0_11, %c0_12], %12 {strides = array<i32>} : memref<16x32xf32, #tpu.memory_space<vmem>>, vector<16x32xf32>,
    } else {
    }
    %c0 = arith.constant 0 : index
    %c0_1 = arith.constant 0 : index
    %3 = vector.load %arg9[%c0, %c0_1] : memref<16x32xf32, #tpu.memory_space<vmem>>, vector<16x32xf32>
    %c0_2 = arith.constant 0 : index
    %c0_3 = arith.constant 0 : index
    %4 = vector.load %arg2[%c0_2, %c0_3] : memref<16x32xf32, #tpu.memory_space<vmem>>, vector<16x32xf32>
    %c0_4 = arith.constant 0 : index
    %c0_5 = arith.constant 0 : index
    %5 = vector.load %arg3[%c0_4, %c0_5] : memref<32x32xf32, #tpu.memory_space<vmem>>, vector<32x32xf32>
    %cst = arith.constant dense<0.000000e+00> : vector<16x32xf32>
    %6 = tpu.matmul %4, %5, %cst {dimension_numbers = #tpu.dot_dimension_numbers<[1], [1], [0], [0], [0, 0, 1, 0], [], []>} : vector<16x32xf32>, vector<32x32xf32>, vector<16x32xf32> -> vector<16x32xf32>
    %7 = arith.addf %3, %6 : vector<16x32xf32>
    %c0_6 = arith.constant 0 : index
    %c0_7 = arith.constant 0 : index
    %8 = vector.load %arg9[%c0_6, %c0_7] : memref<16x32xf32, #tpu.memory_space<vmem>>, vector<16x32xf32>
    tpu.vector_store %arg9[%c0_6, %c0_7], %7 {strides = array<i32>} : memref<16x32xf32, #tpu.memory_space<vmem>>, vector<16x32xf32>,
    %c0_i32_8 = arith.constant 0 : i32
    %9 = arith.cmpi eq, %arg1, %c0_i32_8 : i32
    %10 = arith.extui %9 : i1 to i32
    %c0_i32_9 = arith.constant 0 : i32
    %11 = arith.cmpi ne, %10, %c0_i32_9 : i32
    scf.if %11 {
      %c0_10 = arith.constant 0 : index
      %c0_11 = arith.constant 0 : index
      %12 = vector.load %arg9[%c0_10, %c0_11] : memref<16x32xf32, #tpu.memory_space<vmem>>, vector<16x32xf32>
      %c0_12 = arith.constant 0 : index
      %c0_13 = arith.constant 0 : index
      %13 = vector.load %arg4[%c0_12, %c0_13] : memref<1x32xf32, #tpu.memory_space<vmem>>, vector<1x32xf32>
      %14 = vector.broadcast %13 : vector<1x32xf32> to vector<16x32xf32>
      %15 = arith.addf %12, %14 : vector<16x32xf32>
      %c0_14 = arith.constant 0 : index
      %c0_15 = arith.constant 0 : index
      %16 = vector.load %arg5[%c0_14, %c0_15] : memref<16x32xf32, #tpu.memory_space<vmem>>, vector<16x32xf32>
      %17 = arith.addf %15, %16 : vector<16x32xf32>
      %cst_16 = arith.constant dense<0.000000e+00> : vector<16xf32>
      %18 = vector.multi_reduction <add>, %17, %cst_16 [1] : vector<16x32xf32> to vector<16xf32>
      %19 = vector.shape_cast %18 : vector<16xf32> to vector<16x1xf32>
      %cst_17 = arith.constant 3.200000e+01 : f32
      %20 = vector.broadcast %cst_17 : f32 to vector<16x1xf32>
      %21 = arith.divf %19, %20 : vector<16x1xf32>
      %22 = vector.broadcast %21 : vector<16x1xf32> to vector<16x32xf32>
      %23 = arith.subf %17, %22 : vector<16x32xf32>
      %24 = arith.mulf %23, %23 : vector<16x32xf32>
      %cst_18 = arith.constant dense<0.000000e+00> : vector<16xf32>
      %25 = vector.multi_reduction <add>, %24, %cst_18 [1] : vector<16x32xf32> to vector<16xf32>
      %26 = vector.shape_cast %25 : vector<16xf32> to vector<16x1xf32>
      %cst_19 = arith.constant 3.200000e+01 : f32
      %27 = vector.broadcast %cst_19 : f32 to vector<16x1xf32>
      %28 = arith.divf %26, %27 : vector<16x1xf32>
      %29 = vector.broadcast %21 : vector<16x1xf32> to vector<16x32xf32>
      %30 = arith.subf %17, %29 : vector<16x32xf32>
      %cst_20 = arith.constant 9.99999974E-6 : f32
      %31 = vector.broadcast %cst_20 : f32 to vector<16x1xf32>
      %32 = arith.addf %28, %31 : vector<16x1xf32>
      %33 = math.rsqrt %32 : vector<16x1xf32>
      %34 = vector.broadcast %33 : vector<16x1xf32> to vector<16x32xf32>
      %35 = arith.mulf %30, %34 : vector<16x32xf32>
      %c0_21 = arith.constant 0 : index
      %c0_22 = arith.constant 0 : index
      %36 = vector.load %arg6[%c0_21, %c0_22] : memref<1x32xf32, #tpu.memory_space<vmem>>, vector<1x32xf32>
      %37 = vector.broadcast %36 : vector<1x32xf32> to vector<16x32xf32>
      %38 = arith.mulf %35, %37 : vector<16x32xf32>
      %c0_23 = arith.constant 0 : index
      %c0_24 = arith.constant 0 : index
      %39 = vector.load %arg7[%c0_23, %c0_24] : memref<1x32xf32, #tpu.memory_space<vmem>>, vector<1x32xf32>
      %40 = vector.broadcast %39 : vector<1x32xf32> to vector<16x32xf32>
      %41 = arith.addf %38, %40 : vector<16x32xf32>
      %c0_25 = arith.constant 0 : index
      %c0_26 = arith.constant 0 : index
      %42 = vector.load %arg8[%c0_25, %c0_26] : memref<16x32xf32, #tpu.memory_space<vmem>>, vector<16x32xf32>
      tpu.vector_store %arg8[%c0_25, %c0_26], %41 {strides = array<i32>} : memref<16x32xf32, #tpu.memory_space<vmem>>, vector<16x32xf32>,
    } else {
    }
    return
  }
  func.func @transform_0(%arg0: i32, %arg1: i32) -> (i32, i32) {
    %c0_i32 = arith.constant 0 : i32
    return %arg0, %arg1 : i32, i32
  }
  func.func @transform_1(%arg0: i32, %arg1: i32) -> (i32, i32) {
    %c0_i32 = arith.constant 0 : i32
    %c0_i32_0 = arith.constant 0 : i32
    return %c0_i32, %arg1 : i32, i32
  }
  func.func @transform_2(%arg0: i32, %arg1: i32) -> (i32, i32) {
    %c0_i32 = arith.constant 0 : i32
    %c0_i32_0 = arith.constant 0 : i32
    %c0_i32_1 = arith.constant 0 : i32
    return %c0_i32, %c0_i32_0 : i32, i32
  }
  func.func @transform_3(%arg0: i32, %arg1: i32) -> (i32, i32) {
    %c0_i32 = arith.constant 0 : i32
    %c0_i32_0 = arith.constant 0 : i32
    return %arg0, %c0_i32 : i32, i32
  }
  func.func @transform_4(%arg0: i32, %arg1: i32) -> (i32, i32) {
    %c0_i32 = arith.constant 0 : i32
    %c0_i32_0 = arith.constant 0 : i32
    %c0_i32_1 = arith.constant 0 : i32
    return %c0_i32, %c0_i32_0 : i32, i32
  }
  func.func @transform_5(%arg0: i32, %arg1: i32) -> (i32, i32) {
    %c0_i32 = arith.constant 0 : i32
    %c0_i32_0 = arith.constant 0 : i32
    %c0_i32_1 = arith.constant 0 : i32
    return %c0_i32, %c0_i32_0 : i32, i32
  }
  func.func @transform_6(%arg0: i32, %arg1: i32) -> (i32, i32) {
    %c0_i32 = arith.constant 0 : i32
    %c0_i32_0 = arith.constant 0 : i32
    return %arg0, %c0_i32 : i32, i32
  }
}

module attributes {stable_mosaic.version = 11 : i64} {
  func.func @_linear_kernel(%arg0: i32, %arg1: i32, %arg2: i32, %arg3: memref<16x32xf32, #tpu.memory_space<vmem>>, %arg4: memref<64x32xf32, #tpu.memory_space<vmem>>, %arg5: memref<1x64xf32, #tpu.memory_space<vmem>>, %arg6: memref<16x64xf32, #tpu.memory_space<vmem>>, %arg7: memref<16x64xf32, #tpu.memory_space<vmem>>) attributes {dimension_semantics = [#tpu.dimension_semantics<parallel>, #tpu.dimension_semantics<parallel>, #tpu.dimension_semantics<arbitrary>], iteration_bounds = array<i64: 1, 1, 1>, scalar_prefetch = 0 : i64, scratch_operands = 1 : i64, tpu.core_type = #tpu.core_type<tc>, window_params = [{transform_indices = @transform_0, window_bounds = array<i64: 16, 32>}, {transform_indices = @transform_1, window_bounds = array<i64: 64, 32>}, {transform_indices = @transform_2, window_bounds = array<i64: 1, 64>}, {transform_indices = @transform_3, window_bounds = array<i64: 16, 64>}]} {
    %c0_i32 = arith.constant 0 : i32
    %0 = arith.cmpi eq, %arg2, %c0_i32 : i32
    %1 = arith.extui %0 : i1 to i32
    %c0_i32_0 = arith.constant 0 : i32
    %2 = arith.cmpi ne, %1, %c0_i32_0 : i32
    scf.if %2 {
      %cst_10 = arith.constant 0.000000e+00 : f32
      %12 = vector.broadcast %cst_10 : f32 to vector<16x64xf32>
      %c0_11 = arith.constant 0 : index
      %c0_12 = arith.constant 0 : index
      %13 = vector.load %arg7[%c0_11, %c0_12] : memref<16x64xf32, #tpu.memory_space<vmem>>, vector<16x64xf32>
      tpu.vector_store %arg7[%c0_11, %c0_12], %12 {strides = array<i32>} : memref<16x64xf32, #tpu.memory_space<vmem>>, vector<16x64xf32>,
    } else {
    }
    %c0 = arith.constant 0 : index
    %c0_1 = arith.constant 0 : index
    %3 = vector.load %arg7[%c0, %c0_1] : memref<16x64xf32, #tpu.memory_space<vmem>>, vector<16x64xf32>
    %c0_2 = arith.constant 0 : index
    %c0_3 = arith.constant 0 : index
    %4 = vector.load %arg3[%c0_2, %c0_3] : memref<16x32xf32, #tpu.memory_space<vmem>>, vector<16x32xf32>
    %c0_4 = arith.constant 0 : index
    %c0_5 = arith.constant 0 : index
    %5 = vector.load %arg4[%c0_4, %c0_5] : memref<64x32xf32, #tpu.memory_space<vmem>>, vector<64x32xf32>
    %cst = arith.constant dense<0.000000e+00> : vector<16x64xf32>
    %6 = tpu.matmul %4, %5, %cst {dimension_numbers = #tpu.dot_dimension_numbers<[1], [1], [0], [0], [0, 0, 1, 0], [], []>} : vector<16x32xf32>, vector<64x32xf32>, vector<16x64xf32> -> vector<16x64xf32>
    %7 = arith.addf %3, %6 : vector<16x64xf32>
    %c0_6 = arith.constant 0 : index
    %c0_7 = arith.constant 0 : index
    %8 = vector.load %arg7[%c0_6, %c0_7] : memref<16x64xf32, #tpu.memory_space<vmem>>, vector<16x64xf32>
    tpu.vector_store %arg7[%c0_6, %c0_7], %7 {strides = array<i32>} : memref<16x64xf32, #tpu.memory_space<vmem>>, vector<16x64xf32>,
    %c0_i32_8 = arith.constant 0 : i32
    %9 = arith.cmpi eq, %arg2, %c0_i32_8 : i32
    %10 = arith.extui %9 : i1 to i32
    %c0_i32_9 = arith.constant 0 : i32
    %11 = arith.cmpi ne, %10, %c0_i32_9 : i32
    scf.if %11 {
      %c0_10 = arith.constant 0 : index
      %c0_11 = arith.constant 0 : index
      %12 = vector.load %arg7[%c0_10, %c0_11] : memref<16x64xf32, #tpu.memory_space<vmem>>, vector<16x64xf32>
      %c0_12 = arith.constant 0 : index
      %c0_13 = arith.constant 0 : index
      %13 = vector.load %arg5[%c0_12, %c0_13] : memref<1x64xf32, #tpu.memory_space<vmem>>, vector<1x64xf32>
      %14 = vector.broadcast %13 : vector<1x64xf32> to vector<16x64xf32>
      %15 = arith.addf %12, %14 : vector<16x64xf32>
      %cst_14 = arith.constant 0.000000e+00 : f32
      %16 = vector.broadcast %cst_14 : f32 to vector<16x64xf32>
      %17 = arith.maximumf %15, %16 : vector<16x64xf32>
      %c0_15 = arith.constant 0 : index
      %c0_16 = arith.constant 0 : index
      %18 = vector.load %arg6[%c0_15, %c0_16] : memref<16x64xf32, #tpu.memory_space<vmem>>, vector<16x64xf32>
      tpu.vector_store %arg6[%c0_15, %c0_16], %17 {strides = array<i32>} : memref<16x64xf32, #tpu.memory_space<vmem>>, vector<16x64xf32>,
    } else {
    }
    return
  }
  func.func @transform_0(%arg0: i32, %arg1: i32, %arg2: i32) -> (i32, i32) {
    %c0_i32 = arith.constant 0 : i32
    return %arg0, %arg2 : i32, i32
  }
  func.func @transform_1(%arg0: i32, %arg1: i32, %arg2: i32) -> (i32, i32) {
    %c0_i32 = arith.constant 0 : i32
    return %arg1, %arg2 : i32, i32
  }
  func.func @transform_2(%arg0: i32, %arg1: i32, %arg2: i32) -> (i32, i32) {
    %c0_i32 = arith.constant 0 : i32
    %c0_i32_0 = arith.constant 0 : i32
    return %c0_i32, %arg1 : i32, i32
  }
  func.func @transform_3(%arg0: i32, %arg1: i32, %arg2: i32) -> (i32, i32) {
    %c0_i32 = arith.constant 0 : i32
    return %arg0, %arg1 : i32, i32
  }
}

module attributes {stable_mosaic.version = 11 : i64} {
  func.func @_linear_add_ln_kernel(%arg0: i32, %arg1: i32, %arg2: memref<16x64xf32, #tpu.memory_space<vmem>>, %arg3: memref<32x64xf32, #tpu.memory_space<vmem>>, %arg4: memref<1x32xf32, #tpu.memory_space<vmem>>, %arg5: memref<16x32xf32, #tpu.memory_space<vmem>>, %arg6: memref<1x32xf32, #tpu.memory_space<vmem>>, %arg7: memref<1x32xf32, #tpu.memory_space<vmem>>, %arg8: memref<16x32xf32, #tpu.memory_space<vmem>>, %arg9: memref<16x32xf32, #tpu.memory_space<vmem>>) attributes {dimension_semantics = [#tpu.dimension_semantics<parallel>, #tpu.dimension_semantics<arbitrary>], iteration_bounds = array<i64: 1, 1>, scalar_prefetch = 0 : i64, scratch_operands = 1 : i64, tpu.core_type = #tpu.core_type<tc>, window_params = [{transform_indices = @transform_0, window_bounds = array<i64: 16, 64>}, {transform_indices = @transform_1, window_bounds = array<i64: 32, 64>}, {pipeline_mode = #tpu.pipeline_mode<synchronous>, transform_indices = @transform_2, window_bounds = array<i64: 1, 32>}, {transform_indices = @transform_3, window_bounds = array<i64: 16, 32>}, {pipeline_mode = #tpu.pipeline_mode<synchronous>, transform_indices = @transform_4, window_bounds = array<i64: 1, 32>}, {pipeline_mode = #tpu.pipeline_mode<synchronous>, transform_indices = @transform_5, window_bounds = array<i64: 1, 32>}, {transform_indices = @transform_6, window_bounds = array<i64: 16, 32>}]} {
    %c0_i32 = arith.constant 0 : i32
    %0 = arith.cmpi eq, %arg1, %c0_i32 : i32
    %1 = arith.extui %0 : i1 to i32
    %c0_i32_0 = arith.constant 0 : i32
    %2 = arith.cmpi ne, %1, %c0_i32_0 : i32
    scf.if %2 {
      %cst_10 = arith.constant 0.000000e+00 : f32
      %12 = vector.broadcast %cst_10 : f32 to vector<16x32xf32>
      %c0_11 = arith.constant 0 : index
      %c0_12 = arith.constant 0 : index
      %13 = vector.load %arg9[%c0_11, %c0_12] : memref<16x32xf32, #tpu.memory_space<vmem>>, vector<16x32xf32>
      tpu.vector_store %arg9[%c0_11, %c0_12], %12 {strides = array<i32>} : memref<16x32xf32, #tpu.memory_space<vmem>>, vector<16x32xf32>,
    } else {
    }
    %c0 = arith.constant 0 : index
    %c0_1 = arith.constant 0 : index
    %3 = vector.load %arg9[%c0, %c0_1] : memref<16x32xf32, #tpu.memory_space<vmem>>, vector<16x32xf32>
    %c0_2 = arith.constant 0 : index
    %c0_3 = arith.constant 0 : index
    %4 = vector.load %arg2[%c0_2, %c0_3] : memref<16x64xf32, #tpu.memory_space<vmem>>, vector<16x64xf32>
    %c0_4 = arith.constant 0 : index
    %c0_5 = arith.constant 0 : index
    %5 = vector.load %arg3[%c0_4, %c0_5] : memref<32x64xf32, #tpu.memory_space<vmem>>, vector<32x64xf32>
    %cst = arith.constant dense<0.000000e+00> : vector<16x32xf32>
    %6 = tpu.matmul %4, %5, %cst {dimension_numbers = #tpu.dot_dimension_numbers<[1], [1], [0], [0], [0, 0, 1, 0], [], []>} : vector<16x64xf32>, vector<32x64xf32>, vector<16x32xf32> -> vector<16x32xf32>
    %7 = arith.addf %3, %6 : vector<16x32xf32>
    %c0_6 = arith.constant 0 : index
    %c0_7 = arith.constant 0 : index
    %8 = vector.load %arg9[%c0_6, %c0_7] : memref<16x32xf32, #tpu.memory_space<vmem>>, vector<16x32xf32>
    tpu.vector_store %arg9[%c0_6, %c0_7], %7 {strides = array<i32>} : memref<16x32xf32, #tpu.memory_space<vmem>>, vector<16x32xf32>,
    %c0_i32_8 = arith.constant 0 : i32
    %9 = arith.cmpi eq, %arg1, %c0_i32_8 : i32
    %10 = arith.extui %9 : i1 to i32
    %c0_i32_9 = arith.constant 0 : i32
    %11 = arith.cmpi ne, %10, %c0_i32_9 : i32
    scf.if %11 {
      %c0_10 = arith.constant 0 : index
      %c0_11 = arith.constant 0 : index
      %12 = vector.load %arg9[%c0_10, %c0_11] : memref<16x32xf32, #tpu.memory_space<vmem>>, vector<16x32xf32>
      %c0_12 = arith.constant 0 : index
      %c0_13 = arith.constant 0 : index
      %13 = vector.load %arg4[%c0_12, %c0_13] : memref<1x32xf32, #tpu.memory_space<vmem>>, vector<1x32xf32>
      %14 = vector.broadcast %13 : vector<1x32xf32> to vector<16x32xf32>
      %15 = arith.addf %12, %14 : vector<16x32xf32>
      %c0_14 = arith.constant 0 : index
      %c0_15 = arith.constant 0 : index
      %16 = vector.load %arg5[%c0_14, %c0_15] : memref<16x32xf32, #tpu.memory_space<vmem>>, vector<16x32xf32>
      %17 = arith.addf %15, %16 : vector<16x32xf32>
      %cst_16 = arith.constant dense<0.000000e+00> : vector<16xf32>
      %18 = vector.multi_reduction <add>, %17, %cst_16 [1] : vector<16x32xf32> to vector<16xf32>
      %19 = vector.shape_cast %18 : vector<16xf32> to vector<16x1xf32>
      %cst_17 = arith.constant 3.200000e+01 : f32
      %20 = vector.broadcast %cst_17 : f32 to vector<16x1xf32>
      %21 = arith.divf %19, %20 : vector<16x1xf32>
      %22 = vector.broadcast %21 : vector<16x1xf32> to vector<16x32xf32>
      %23 = arith.subf %17, %22 : vector<16x32xf32>
      %24 = arith.mulf %23, %23 : vector<16x32xf32>
      %cst_18 = arith.constant dense<0.000000e+00> : vector<16xf32>
      %25 = vector.multi_reduction <add>, %24, %cst_18 [1] : vector<16x32xf32> to vector<16xf32>
      %26 = vector.shape_cast %25 : vector<16xf32> to vector<16x1xf32>
      %cst_19 = arith.constant 3.200000e+01 : f32
      %27 = vector.broadcast %cst_19 : f32 to vector<16x1xf32>
      %28 = arith.divf %26, %27 : vector<16x1xf32>
      %29 = vector.broadcast %21 : vector<16x1xf32> to vector<16x32xf32>
      %30 = arith.subf %17, %29 : vector<16x32xf32>
      %cst_20 = arith.constant 9.99999974E-6 : f32
      %31 = vector.broadcast %cst_20 : f32 to vector<16x1xf32>
      %32 = arith.addf %28, %31 : vector<16x1xf32>
      %33 = math.rsqrt %32 : vector<16x1xf32>
      %34 = vector.broadcast %33 : vector<16x1xf32> to vector<16x32xf32>
      %35 = arith.mulf %30, %34 : vector<16x32xf32>
      %c0_21 = arith.constant 0 : index
      %c0_22 = arith.constant 0 : index
      %36 = vector.load %arg6[%c0_21, %c0_22] : memref<1x32xf32, #tpu.memory_space<vmem>>, vector<1x32xf32>
      %37 = vector.broadcast %36 : vector<1x32xf32> to vector<16x32xf32>
      %38 = arith.mulf %35, %37 : vector<16x32xf32>
      %c0_23 = arith.constant 0 : index
      %c0_24 = arith.constant 0 : index
      %39 = vector.load %arg7[%c0_23, %c0_24] : memref<1x32xf32, #tpu.memory_space<vmem>>, vector<1x32xf32>
      %40 = vector.broadcast %39 : vector<1x32xf32> to vector<16x32xf32>
      %41 = arith.addf %38, %40 : vector<16x32xf32>
      %c0_25 = arith.constant 0 : index
      %c0_26 = arith.constant 0 : index
      %42 = vector.load %arg8[%c0_25, %c0_26] : memref<16x32xf32, #tpu.memory_space<vmem>>, vector<16x32xf32>
      tpu.vector_store %arg8[%c0_25, %c0_26], %41 {strides = array<i32>} : memref<16x32xf32, #tpu.memory_space<vmem>>, vector<16x32xf32>,
    } else {
    }
    return
  }
  func.func @transform_0(%arg0: i32, %arg1: i32) -> (i32, i32) {
    %c0_i32 = arith.constant 0 : i32
    return %arg0, %arg1 : i32, i32
  }
  func.func @transform_1(%arg0: i32, %arg1: i32) -> (i32, i32) {
    %c0_i32 = arith.constant 0 : i32
    %c0_i32_0 = arith.constant 0 : i32
    return %c0_i32, %arg1 : i32, i32
  }
  func.func @transform_2(%arg0: i32, %arg1: i32) -> (i32, i32) {
    %c0_i32 = arith.constant 0 : i32
    %c0_i32_0 = arith.constant 0 : i32
    %c0_i32_1 = arith.constant 0 : i32
    return %c0_i32, %c0_i32_0 : i32, i32
  }
  func.func @transform_3(%arg0: i32, %arg1: i32) -> (i32, i32) {
    %c0_i32 = arith.constant 0 : i32
    %c0_i32_0 = arith.constant 0 : i32
    return %arg0, %c0_i32 : i32, i32
  }
  func.func @transform_4(%arg0: i32, %arg1: i32) -> (i32, i32) {
    %c0_i32 = arith.constant 0 : i32
    %c0_i32_0 = arith.constant 0 : i32
    %c0_i32_1 = arith.constant 0 : i32
    return %c0_i32, %c0_i32_0 : i32, i32
  }
  func.func @transform_5(%arg0: i32, %arg1: i32) -> (i32, i32) {
    %c0_i32 = arith.constant 0 : i32
    %c0_i32_0 = arith.constant 0 : i32
    %c0_i32_1 = arith.constant 0 : i32
    return %c0_i32, %c0_i32_0 : i32, i32
  }
  func.func @transform_6(%arg0: i32, %arg1: i32) -> (i32, i32) {
    %c0_i32 = arith.constant 0 : i32
    %c0_i32_0 = arith.constant 0 : i32
    return %arg0, %c0_i32 : i32, i32
  }
}

</mosaic_0001>

<llo_original>
// kernel: transformer_encoder_layer.5
$region0: #{transformer_encoder_layer.5}
  #allocation0 [shape = 'u32[]', space=smem, size = 0x4, offset = 0x4, fixed_abs, tag = 'smem constant byte address 0x4 - core index']
  #allocation1 [shape = 'u32[72,128]{1,0:T(1,128)}', space=vmem, size = 0x9000, scoped, tag = 'internal scratch']
  #allocation2 [shape = 'f32[16,96]{1,0:T(8,128)}', space=vmem, size = 0x2000, scoped, tag = 'scratch operand']
  %s0 = inlined_call_operand.vmem [shape: f32[16,32], index: 0, kind: input, shape index: {}]
  %s1 = inlined_call_operand.vmem [shape: f32[96,32], index: 1, kind: input, shape index: {}]
  %s2 = inlined_call_operand.vmem [shape: f32[1,96], index: 2, kind: input, shape index: {}]
  %s3 = inlined_call_operand.vmem [shape: f32[16,96], index: 3, kind: output, shape index: {}]
  %s4 = sld [smem:[#allocation0]]
  $region30: #{transformer_encoder_layer.5} parent=0
    _
  %s6 = ssub.s32 1, %s4
  %s7 = scalar_select 0, %s6, %s4
  // Predicated region
  $region2: #{transformer_encoder_layer.5} parent=0 // pred_check
    _
  $region3: #{transformer_encoder_layer.5} parent=0 // pred_check_branch
    %9 = sbr.rel (0) target = $region5
  $region4: #{transformer_encoder_layer.5} parent=0 // pred_region
    _
  $region5: #{transformer_encoder_layer.5} parent=0 // pred_fallthru
    _
  // Predicated region
  $region6: #{transformer_encoder_layer.5} parent=0 // pred_check
    _
  $region7: #{transformer_encoder_layer.5} parent=0 // pred_check_branch
    %11 = sbr.rel (0) target = $region9
  $region8: #{transformer_encoder_layer.5} parent=0 // pred_region
    _
  $region9: #{transformer_encoder_layer.5} parent=0 // pred_fallthru
    _
  // Predicated region
  $region10: #{transformer_encoder_layer.5} parent=0 // pred_check
    _
  $region11: #{transformer_encoder_layer.5} parent=0 // pred_check_branch
    %13 = sbr.rel (0) target = $region13
  $region12: #{transformer_encoder_layer.5} parent=0 // pred_region
    _
  $region13: #{transformer_encoder_layer.5} parent=0 // pred_fallthru
    _
  %p14 = scmp.eq.s32.totalorder 0, 0
  // Predicated region
  $region14: #{transformer_encoder_layer.5} parent=0 // pred_check
    %p15 = pneg %p14
  $region15: #{transformer_encoder_layer.5} parent=0 // pred_check_branch
    %17 = sbr.rel (%p15) target = $region17
  $region16: #{transformer_encoder_layer.5} parent=0 // pred_region
    %vm18 = vcmask 785408
    %19 = vst.msk [vmem:[#allocation2] sm:$0xff] %vm18, 0.0
    %20 = vst.msk [vmem:[#allocation2 + $0x8] sm:$0xff] %vm18, 0.0
  $region17: #{transformer_encoder_layer.5} parent=0 // pred_fallthru
    _
  %v21 = vld [vmem:[#allocation2] sm:$0xff]
  %v22 = vld [vmem:[#allocation2 + $0x8] sm:$0xff]
  %v23 = vld [vmem:[%s0] sm:$0xff]
  %v24 = vld [vmem:[%s0 + $0x8] sm:$0xff]
  %v25 = vld [vmem:[%s1] sm:$0xff]
  %v26 = vld [vmem:[%s1 + $0x8] sm:$0xff]
  %v27 = vld [vmem:[%s1 + $0x10] sm:$0xff]
  %v28 = vld [vmem:[%s1 + $0x18] sm:$0xff]
  %v29 = vld [vmem:[%s1 + $0x20] sm:$0xff]
  %v30 = vld [vmem:[%s1 + $0x28] sm:$0xff]
  %v31 = vld [vmem:[%s1 + $0x30] sm:$0xff]
  %v32 = vld [vmem:[%s1 + $0x38] sm:$0xff]
  %v33 = vld [vmem:[%s1 + $0x40] sm:$0xff]
  %v34 = vld [vmem:[%s1 + $0x48] sm:$0xff]
  %v35 = vld [vmem:[%s1 + $0x50] sm:$0xff]
  %v36 = vld [vmem:[%s1 + $0x58] sm:$0xff]
  %vm37 = vcmask 261120
  %v39 = vsel %vm37, %v23, 0
  %v42 = vsel %vm37, %v24, 0
  %v45 = vsel %vm37, %v25, 0
  %v48 = vsel %vm37, %v26, 0
  %v51 = vsel %vm37, %v27, 0
  %v54 = vsel %vm37, %v28, 0
  %v57 = vsel %vm37, %v29, 0
  %v60 = vsel %vm37, %v30, 0
  %v63 = vsel %vm37, %v31, 0
  %v66 = vsel %vm37, %v32, 0
  %v69 = vsel %vm37, %v33, 0
  %v72 = vsel %vm37, %v34, 0
  %v75 = vsel %vm37, %v35, 0
  %v78 = vsel %vm37, %v36, 0
  %80 = vmatpush.xpose.msra.mxu0 0.0
  %81 = vmatpush.xpose.msra.mxu0 0.0
  %82 = vmatpush.xpose.msra.mxu0 0.0
  %83 = vmatpush.xpose.msra.mxu0 0.0
  %84 = vmatpush.xpose.msra.mxu0 %v78
  %85 = vmatpush.xpose.msra.mxu0 %v75
  %86 = vmatpush.xpose.msra.mxu0 %v72
  %87 = vmatpush.xpose.msra.mxu0 %v69
  %88 = vmatpush.xpose.msra.mxu0 %v66
  %89 = vmatpush.xpose.msra.mxu0 %v63
  %90 = vmatpush.xpose.msra.mxu0 %v60
  %91 = vmatpush.xpose.msra.mxu0 %v57
  %92 = vmatpush.xpose.msra.mxu0 %v54
  %93 = vmatpush.xpose.msra.mxu0 %v51
  %94 = vmatpush.xpose.msra.mxu0 %v48
  %95 = vmatpush.xpose.msra.mxu0 %v45
  %96 = vmatmul.f32.gmra.mxu0 %v39
  %v97 = vpop.f32.mrf.mxu0
  %v98 = vadd.f32 0.0, %v97
  %99 = vmatmul.f32.gmra.mxu0 %v42
  %v100 = vpop.f32.mrf.mxu0
  %v101 = vadd.f32 0.0, %v100
  %102 = vdwg.mxu0
  %v103 = vadd.f32 %v21, %v98
  %v104 = vadd.f32 %v22, %v101
  %vm105 = vcmask 785408
  %106 = vst.msk [vmem:[#allocation2] sm:$0xff] %vm105, %v103
  %107 = vst.msk [vmem:[#allocation2 + $0x8] sm:$0xff] %vm105, %v104
  // Predicated region
  $region18: #{transformer_encoder_layer.5} parent=0 // pred_check
    %p108 = pneg %p14
  $region19: #{transformer_encoder_layer.5} parent=0 // pred_check_branch
    %110 = sbr.rel (%p108) target = $region21
  $region20: #{transformer_encoder_layer.5} parent=0 // pred_region
    %v111 = vld [vmem:[#allocation2] sm:$0xff]
    %v112 = vld [vmem:[#allocation2 + $0x8] sm:$0xff]
    %v113 = vld [vmem:[%s2] sm:$0x1]
    %v115 = vperm.slane %v113, 0
    %v117 = vadd.f32 %v111, %v115
    %v118 = vadd.f32 %v112, %v115
    %119 = vst.msk [vmem:[%s3] sm:$0xff] %vm105, %v117
    %120 = vst.msk [vmem:[%s3 + $0x8] sm:$0xff] %vm105, %v118
  $region21: #{transformer_encoder_layer.5} parent=0 // pred_fallthru
    _
  // Predicated region
  $region22: #{transformer_encoder_layer.5} parent=0 // pred_check
    _
  $region23: #{transformer_encoder_layer.5} parent=0 // pred_check_branch
    %122 = sbr.rel (0) target = $region25
  $region24: #{transformer_encoder_layer.5} parent=0 // pred_region
    _
  $region25: #{transformer_encoder_layer.5} parent=0 // pred_fallthru
    _
  // Predicated region
  $region26: #{transformer_encoder_layer.5} parent=0 // pred_check
    _
  $region27: #{transformer_encoder_layer.5} parent=0 // pred_check_branch
    %124 = sbr.rel (0) target = $region29
  $region28: #{transformer_encoder_layer.5} parent=0 // pred_region
    _
  $region29: #{transformer_encoder_layer.5} parent=0 // pred_fallthru
    _

// kernel: transformer_encoder_layer.7
$region0: #{transformer_encoder_layer.7}
  #allocation0 [shape = 'u32[]', space=smem, size = 0x4, offset = 0x4, fixed_abs, tag = 'smem constant byte address 0x4 - core index']
  #allocation1 [shape = 'u32[72,128]{1,0:T(1,128)}', space=vmem, size = 0x9000, scoped, tag = 'internal scratch']
  #allocation2 [shape = 'f32[16,32]{1,0:T(8,128)}', space=vmem, size = 0x2000, scoped, tag = 'scratch operand']
  %s0 = inlined_call_operand.vmem [shape: f32[16,32], index: 0, kind: input, shape index: {}]
  %s1 = inlined_call_operand.vmem [shape: f32[32,32], index: 1, kind: input, shape index: {}]
  %s2 = inlined_call_operand.vmem [shape: f32[1,32], index: 2, kind: input, shape index: {}]
  %s3 = inlined_call_operand.vmem [shape: f32[16,32], index: 3, kind: input, shape index: {}]
  %s4 = inlined_call_operand.vmem [shape: f32[1,32], index: 4, kind: input, shape index: {}]
  %s5 = inlined_call_operand.vmem [shape: f32[1,32], index: 5, kind: input, shape index: {}]
  %s6 = inlined_call_operand.vmem [shape: f32[16,32], index: 6, kind: output, shape index: {}]
  %s7 = sld [smem:[#allocation0]]
  $region42: #{transformer_encoder_layer.7} parent=0
    _
  %s9 = ssub.s32 1, %s7
  %s10 = scalar_select 0, %s9, %s7
  // Predicated region
  $region2: #{transformer_encoder_layer.7} parent=0 // pred_check
    _
  $region3: #{transformer_encoder_layer.7} parent=0 // pred_check_branch
    %12 = sbr.rel (0) target = $region5
  $region4: #{transformer_encoder_layer.7} parent=0 // pred_region
    _
  $region5: #{transformer_encoder_layer.7} parent=0 // pred_fallthru
    _
  // Predicated region
  $region6: #{transformer_encoder_layer.7} parent=0 // pred_check
    _
  $region7: #{transformer_encoder_layer.7} parent=0 // pred_check_branch
    %14 = sbr.rel (0) target = $region9
  $region8: #{transformer_encoder_layer.7} parent=0 // pred_region
    _
  $region9: #{transformer_encoder_layer.7} parent=0 // pred_fallthru
    _
  // Predicated region
  $region10: #{transformer_encoder_layer.7} parent=0 // pred_check
    _
  $region11: #{transformer_encoder_layer.7} parent=0 // pred_check_branch
    %16 = sbr.rel (0) target = $region13
  $region12: #{transformer_encoder_layer.7} parent=0 // pred_region
    _
  $region13: #{transformer_encoder_layer.7} parent=0 // pred_fallthru
    _
  // Predicated region
  $region14: #{transformer_encoder_layer.7} parent=0 // pred_check
    _
  $region15: #{transformer_encoder_layer.7} parent=0 // pred_check_branch
    %18 = sbr.rel (0) target = $region17
  $region16: #{transformer_encoder_layer.7} parent=0 // pred_region
    _
  $region17: #{transformer_encoder_layer.7} parent=0 // pred_fallthru
    _
  // Predicated region
  $region18: #{transformer_encoder_layer.7} parent=0 // pred_check
    _
  $region19: #{transformer_encoder_layer.7} parent=0 // pred_check_branch
    %20 = sbr.rel (0) target = $region21
  $region20: #{transformer_encoder_layer.7} parent=0 // pred_region
    _
  $region21: #{transformer_encoder_layer.7} parent=0 // pred_fallthru
    _
  // Predicated region
  $region22: #{transformer_encoder_layer.7} parent=0 // pred_check
    _
  $region23: #{transformer_encoder_layer.7} parent=0 // pred_check_branch
    %22 = sbr.rel (0) target = $region25
  $region24: #{transformer_encoder_layer.7} parent=0 // pred_region
    _
  $region25: #{transformer_encoder_layer.7} parent=0 // pred_fallthru
    _
  %p23 = scmp.eq.s32.totalorder 0, 0
  // Predicated region
  $region26: #{transformer_encoder_layer.7} parent=0 // pred_check
    %p24 = pneg %p23
  $region27: #{transformer_encoder_layer.7} parent=0 // pred_check_branch
    %26 = sbr.rel (%p24) target = $region29
  $region28: #{transformer_encoder_layer.7} parent=0 // pred_region
    %vm27 = vcmask 261120
    %28 = vst.msk [vmem:[#allocation2] sm:$0xff] %vm27, 0.0
    %29 = vst.msk [vmem:[#allocation2 + $0x8] sm:$0xff] %vm27, 0.0
  $region29: #{transformer_encoder_layer.7} parent=0 // pred_fallthru
    _
  %v30 = vld [vmem:[#allocation2] sm:$0xff]
  %v31 = vld [vmem:[#allocation2 + $0x8] sm:$0xff]
  %v32 = vld [vmem:[%s0] sm:$0xff]
  %v33 = vld [vmem:[%s0 + $0x8] sm:$0xff]
  %v34 = vld [vmem:[%s1] sm:$0xff]
  %v35 = vld [vmem:[%s1 + $0x8] sm:$0xff]
  %v36 = vld [vmem:[%s1 + $0x10] sm:$0xff]
  %v37 = vld [vmem:[%s1 + $0x18] sm:$0xff]
  %vm38 = vcmask 261120
  %v40 = vsel %vm38, %v32, 0
  %v43 = vsel %vm38, %v33, 0
  %v46 = vsel %vm38, %v34, 0
  %v49 = vsel %vm38, %v35, 0
  %v52 = vsel %vm38, %v36, 0
  %v55 = vsel %vm38, %v37, 0
  %57 = vmatpush.xpose.msra.mxu0 0.0
  %58 = vmatpush.xpose.msra.mxu0 0.0
  %59 = vmatpush.xpose.msra.mxu0 0.0
  %60 = vmatpush.xpose.msra.mxu0 0.0
  %61 = vmatpush.xpose.msra.mxu0 0.0
  %62 = vmatpush.xpose.msra.mxu0 0.0
  %63 = vmatpush.xpose.msra.mxu0 0.0
  %64 = vmatpush.xpose.msra.mxu0 0.0
  %65 = vmatpush.xpose.msra.mxu0 0.0
  %66 = vmatpush.xpose.msra.mxu0 0.0
  %67 = vmatpush.xpose.msra.mxu0 0.0
  %68 = vmatpush.xpose.msra.mxu0 0.0
  %69 = vmatpush.xpose.msra.mxu0 %v55
  %70 = vmatpush.xpose.msra.mxu0 %v52
  %71 = vmatpush.xpose.msra.mxu0 %v49
  %72 = vmatpush.xpose.msra.mxu0 %v46
  %73 = vmatmul.f32.gmra.mxu0 %v40
  %v74 = vpop.f32.mrf.mxu0
  %v75 = vadd.f32 0.0, %v74
  %76 = vmatmul.f32.gmra.mxu0 %v43
  %v77 = vpop.f32.mrf.mxu0
  %v78 = vadd.f32 0.0, %v77
  %79 = vdwg.mxu0
  %v80 = vadd.f32 %v30, %v75
  %v81 = vadd.f32 %v31, %v78
  %82 = vst.msk [vmem:[#allocation2] sm:$0xff] %vm38, %v80
  %83 = vst.msk [vmem:[#allocation2 + $0x8] sm:$0xff] %vm38, %v81
  // Predicated region
  $region30: #{transformer_encoder_layer.7} parent=0 // pred_check
    %p84 = pneg %p23
  $region31: #{transformer_encoder_layer.7} parent=0 // pred_check_branch
    %86 = sbr.rel (%p84) target = $region33
  $region32: #{transformer_encoder_layer.7} parent=0 // pred_region
    %v87 = vld [vmem:[#allocation2] sm:$0xff]
    %v88 = vld [vmem:[#allocation2 + $0x8] sm:$0xff]
    %v89 = vld [vmem:[%s2] sm:$0x1]
    %v91 = vperm.slane %v89, 0
    %v93 = vadd.f32 %v87, %v91
    %v94 = vadd.f32 %v88, %v91
    %v95 = vld [vmem:[%s3] sm:$0xff]
    %v96 = vld [vmem:[%s3 + $0x8] sm:$0xff]
    %v97 = vadd.f32 %v93, %v95
    %v98 = vadd.f32 %v94, %v96
    %v99 = vsel %vm38, %v97, 0.0
    %100 = vadd.xlane.f32.xlu0 %v99
    %v101 = vpop.xlane.xlu0 %100
    %v102 = vsel %vm38, %v98, 0.0
    %103 = vadd.xlane.f32.xlu0 %v102
    %v104 = vpop.xlane.xlu0 %103
    %v105 = vrcp.pop 32.0
    %v106 = vmul.f32 32.0, %v105
    %v107 = vsub.f32 1.0, %v106
    %v108 = vmul.f32 %v105, %v107
    %v109 = vadd.f32 %v105, %v108
    %vm110 = vweird.f32 %v105
    %v111 = vsel %vm110, %v105, %v109
    %v112 = vmul.f32 %v101, %v111
    %v113 = vmul.f32 %v104, %v111
    %v114 = vsub.f32 %v97, %v112
    %v115 = vsub.f32 %v98, %v113
    %v116 = vmul.f32 %v114, %v114
    %v117 = vmul.f32 %v115, %v115
    %v118 = vsel %vm38, %v116, 0.0
    %119 = vadd.xlane.f32.xlu0 %v118
    %v120 = vpop.xlane.xlu0 %119
    %v121 = vsel %vm38, %v117, 0.0
    %122 = vadd.xlane.f32.xlu0 %v121
    %v123 = vpop.xlane.xlu0 %122
    %v124 = vmul.f32 %v120, %v111
    %v125 = vmul.f32 %v123, %v111
    %v126 = vadd.f32 %v124, 1e-05
    %v127 = vadd.f32 %v125, 1e-05
    %v128 = vrsqrt.pop %v126
    %v129 = vmul.f32 %v128, %v126
    %v130 = vmul.f32 %v129, %v128
    %v131 = vmul.f32 0.5, %v130
    %v132 = vsub.f32 1.5, %v131
    %v133 = vmul.f32 %v128, %v132
    %vm134 = vweird.f32 %v126
    %vm135 = vweird.f32 %v128
    %vm136 = vmor %vm134, %vm135
    %v137 = vsel %vm136, %v128, %v133
    %v138 = vrsqrt.pop %v127
    %v139 = vmul.f32 %v138, %v127
    %v140 = vmul.f32 %v139, %v138
    %v141 = vmul.f32 0.5, %v140
    %v142 = vsub.f32 1.5, %v141
    %v143 = vmul.f32 %v138, %v142
    %vm144 = vweird.f32 %v127
    %vm145 = vweird.f32 %v138
    %vm146 = vmor %vm144, %vm145
    %v147 = vsel %vm146, %v138, %v143
    %v148 = vmul.f32 %v114, %v137
    %v149 = vmul.f32 %v115, %v147
    %v150 = vld [vmem:[%s4] sm:$0x1]
    %v152 = vperm.slane %v150, 0
    %v154 = vmul.f32 %v148, %v152
    %v155 = vmul.f32 %v149, %v152
    %v156 = vld [vmem:[%s5] sm:$0x1]
    %v158 = vperm.slane %v156, 0
    %v160 = vadd.f32 %v154, %v158
    %v161 = vadd.f32 %v155, %v158
    %162 = vst.msk [vmem:[%s6] sm:$0xff] %vm38, %v160
    %163 = vst.msk [vmem:[%s6 + $0x8] sm:$0xff] %vm38, %v161
  $region33: #{transformer_encoder_layer.7} parent=0 // pred_fallthru
    _
  // Predicated region
  $region34: #{transformer_encoder_layer.7} parent=0 // pred_check
    _
  $region35: #{transformer_encoder_layer.7} parent=0 // pred_check_branch
    %165 = sbr.rel (0) target = $region37
  $region36: #{transformer_encoder_layer.7} parent=0 // pred_region
    _
  $region37: #{transformer_encoder_layer.7} parent=0 // pred_fallthru
    _
  // Predicated region
  $region38: #{transformer_encoder_layer.7} parent=0 // pred_check
    _
  $region39: #{transformer_encoder_layer.7} parent=0 // pred_check_branch
    %167 = sbr.rel (0) target = $region41
  $region40: #{transformer_encoder_layer.7} parent=0 // pred_region
    _
  $region41: #{transformer_encoder_layer.7} parent=0 // pred_fallthru
    _

// kernel: transformer_encoder_layer.8
$region0: #{transformer_encoder_layer.8}
  #allocation0 [shape = 'u32[]', space=smem, size = 0x4, offset = 0x4, fixed_abs, tag = 'smem constant byte address 0x4 - core index']
  #allocation1 [shape = 'u32[72,128]{1,0:T(1,128)}', space=vmem, size = 0x9000, scoped, tag = 'internal scratch']
  #allocation2 [shape = 'f32[16,64]{1,0:T(8,128)}', space=vmem, size = 0x2000, scoped, tag = 'scratch operand']
  %s0 = inlined_call_operand.vmem [shape: f32[16,32], index: 0, kind: input, shape index: {}]
  %s1 = inlined_call_operand.vmem [shape: f32[64,32], index: 1, kind: input, shape index: {}]
  %s2 = inlined_call_operand.vmem [shape: f32[1,64], index: 2, kind: input, shape index: {}]
  %s3 = inlined_call_operand.vmem [shape: f32[16,64], index: 3, kind: output, shape index: {}]
  %s4 = sld [smem:[#allocation0]]
  $region30: #{transformer_encoder_layer.8} parent=0
    _
  %s6 = ssub.s32 1, %s4
  %s7 = scalar_select 0, %s6, %s4
  // Predicated region
  $region2: #{transformer_encoder_layer.8} parent=0 // pred_check
    _
  $region3: #{transformer_encoder_layer.8} parent=0 // pred_check_branch
    %9 = sbr.rel (0) target = $region5
  $region4: #{transformer_encoder_layer.8} parent=0 // pred_region
    _
  $region5: #{transformer_encoder_layer.8} parent=0 // pred_fallthru
    _
  // Predicated region
  $region6: #{transformer_encoder_layer.8} parent=0 // pred_check
    _
  $region7: #{transformer_encoder_layer.8} parent=0 // pred_check_branch
    %11 = sbr.rel (0) target = $region9
  $region8: #{transformer_encoder_layer.8} parent=0 // pred_region
    _
  $region9: #{transformer_encoder_layer.8} parent=0 // pred_fallthru
    _
  // Predicated region
  $region10: #{transformer_encoder_layer.8} parent=0 // pred_check
    _
  $region11: #{transformer_encoder_layer.8} parent=0 // pred_check_branch
    %13 = sbr.rel (0) target = $region13
  $region12: #{transformer_encoder_layer.8} parent=0 // pred_region
    _
  $region13: #{transformer_encoder_layer.8} parent=0 // pred_fallthru
    _
  %p14 = scmp.eq.s32.totalorder 0, 0
  // Predicated region
  $region14: #{transformer_encoder_layer.8} parent=0 // pred_check
    %p15 = pneg %p14
  $region15: #{transformer_encoder_layer.8} parent=0 // pred_check_branch
    %17 = sbr.rel (%p15) target = $region17
  $region16: #{transformer_encoder_layer.8} parent=0 // pred_region
    %vm18 = vcmask 523264
    %19 = vst.msk [vmem:[#allocation2] sm:$0xff] %vm18, 0.0
    %20 = vst.msk [vmem:[#allocation2 + $0x8] sm:$0xff] %vm18, 0.0
  $region17: #{transformer_encoder_layer.8} parent=0 // pred_fallthru
    _
  %v21 = vld [vmem:[#allocation2] sm:$0xff]
  %v22 = vld [vmem:[#allocation2 + $0x8] sm:$0xff]
  %v23 = vld [vmem:[%s0] sm:$0xff]
  %v24 = vld [vmem:[%s0 + $0x8] sm:$0xff]
  %v25 = vld [vmem:[%s1] sm:$0xff]
  %v26 = vld [vmem:[%s1 + $0x8] sm:$0xff]
  %v27 = vld [vmem:[%s1 + $0x10] sm:$0xff]
  %v28 = vld [vmem:[%s1 + $0x18] sm:$0xff]
  %v29 = vld [vmem:[%s1 + $0x20] sm:$0xff]
  %v30 = vld [vmem:[%s1 + $0x28] sm:$0xff]
  %v31 = vld [vmem:[%s1 + $0x30] sm:$0xff]
  %v32 = vld [vmem:[%s1 + $0x38] sm:$0xff]
  %vm33 = vcmask 261120
  %v35 = vsel %vm33, %v23, 0
  %v38 = vsel %vm33, %v24, 0
  %v41 = vsel %vm33, %v25, 0
  %v44 = vsel %vm33, %v26, 0
  %v47 = vsel %vm33, %v27, 0
  %v50 = vsel %vm33, %v28, 0
  %v53 = vsel %vm33, %v29, 0
  %v56 = vsel %vm33, %v30, 0
  %v59 = vsel %vm33, %v31, 0
  %v62 = vsel %vm33, %v32, 0
  %64 = vmatpush.xpose.msra.mxu0 0.0
  %65 = vmatpush.xpose.msra.mxu0 0.0
  %66 = vmatpush.xpose.msra.mxu0 0.0
  %67 = vmatpush.xpose.msra.mxu0 0.0
  %68 = vmatpush.xpose.msra.mxu0 0.0
  %69 = vmatpush.xpose.msra.mxu0 0.0
  %70 = vmatpush.xpose.msra.mxu0 0.0
  %71 = vmatpush.xpose.msra.mxu0 0.0
  %72 = vmatpush.xpose.msra.mxu0 %v62
  %73 = vmatpush.xpose.msra.mxu0 %v59
  %74 = vmatpush.xpose.msra.mxu0 %v56
  %75 = vmatpush.xpose.msra.mxu0 %v53
  %76 = vmatpush.xpose.msra.mxu0 %v50
  %77 = vmatpush.xpose.msra.mxu0 %v47
  %78 = vmatpush.xpose.msra.mxu0 %v44
  %79 = vmatpush.xpose.msra.mxu0 %v41
  %80 = vmatmul.f32.gmra.mxu0 %v35
  %v81 = vpop.f32.mrf.mxu0
  %v82 = vadd.f32 0.0, %v81
  %83 = vmatmul.f32.gmra.mxu0 %v38
  %v84 = vpop.f32.mrf.mxu0
  %v85 = vadd.f32 0.0, %v84
  %86 = vdwg.mxu0
  %v87 = vadd.f32 %v21, %v82
  %v88 = vadd.f32 %v22, %v85
  %vm89 = vcmask 523264
  %90 = vst.msk [vmem:[#allocation2] sm:$0xff] %vm89, %v87
  %91 = vst.msk [vmem:[#allocation2 + $0x8] sm:$0xff] %vm89, %v88
  // Predicated region
  $region18: #{transformer_encoder_layer.8} parent=0 // pred_check
    %p92 = pneg %p14
  $region19: #{transformer_encoder_layer.8} parent=0 // pred_check_branch
    %94 = sbr.rel (%p92) target = $region21
  $region20: #{transformer_encoder_layer.8} parent=0 // pred_region
    %v95 = vld [vmem:[#allocation2] sm:$0xff]
    %v96 = vld [vmem:[#allocation2 + $0x8] sm:$0xff]
    %v97 = vld [vmem:[%s2] sm:$0x1]
    %v99 = vperm.slane %v97, 0
    %v101 = vadd.f32 %v95, %v99
    %v102 = vadd.f32 %v96, %v99
    %v103 = vmax.f32 %v101, 0.0
    %v104 = vmax.f32 %v102, 0.0
    %105 = vst.msk [vmem:[%s3] sm:$0xff] %vm89, %v103
    %106 = vst.msk [vmem:[%s3 + $0x8] sm:$0xff] %vm89, %v104
  $region21: #{transformer_encoder_layer.8} parent=0 // pred_fallthru
    _
  // Predicated region
  $region22: #{transformer_encoder_layer.8} parent=0 // pred_check
    _
  $region23: #{transformer_encoder_layer.8} parent=0 // pred_check_branch
    %108 = sbr.rel (0) target = $region25
  $region24: #{transformer_encoder_layer.8} parent=0 // pred_region
    _
  $region25: #{transformer_encoder_layer.8} parent=0 // pred_fallthru
    _
  // Predicated region
  $region26: #{transformer_encoder_layer.8} parent=0 // pred_check
    _
  $region27: #{transformer_encoder_layer.8} parent=0 // pred_check_branch
    %110 = sbr.rel (0) target = $region29
  $region28: #{transformer_encoder_layer.8} parent=0 // pred_region
    _
  $region29: #{transformer_encoder_layer.8} parent=0 // pred_fallthru
    _

// kernel: transformer_encoder_layer.9
$region0: #{transformer_encoder_layer.9}
  #allocation0 [shape = 'u32[]', space=smem, size = 0x4, offset = 0x4, fixed_abs, tag = 'smem constant byte address 0x4 - core index']
  #allocation1 [shape = 'u32[72,128]{1,0:T(1,128)}', space=vmem, size = 0x9000, scoped, tag = 'internal scratch']
  #allocation2 [shape = 'f32[16,32]{1,0:T(8,128)}', space=vmem, size = 0x2000, scoped, tag = 'scratch operand']
  %s0 = inlined_call_operand.vmem [shape: f32[16,64], index: 0, kind: input, shape index: {}]
  %s1 = inlined_call_operand.vmem [shape: f32[32,64], index: 1, kind: input, shape index: {}]
  %s2 = inlined_call_operand.vmem [shape: f32[1,32], index: 2, kind: input, shape index: {}]
  %s3 = inlined_call_operand.vmem [shape: f32[16,32], index: 3, kind: input, shape index: {}]
  %s4 = inlined_call_operand.vmem [shape: f32[1,32], index: 4, kind: input, shape index: {}]
  %s5 = inlined_call_operand.vmem [shape: f32[1,32], index: 5, kind: input, shape index: {}]
  %s6 = inlined_call_operand.hbm [shape: f32[16,32], index: 6, kind: output, shape index: {}]
  %s7 = sld [smem:[#allocation0]]
  $region42: #{transformer_encoder_layer.9} parent=0
    _
  %s9 = ssub.s32 1, %s7
  %s10 = scalar_select 0, %s9, %s7
  $region1: #{transformer_encoder_layer.9} parent=0
    #allocation3 [shape = 'u8[8192]{0}', space=vmem, size = 0x2000, scoped, tag = 'output window, operand 0, single buffered']
    #allocation4 [shape = 's32[1]{0}', space=sflag, size = 0x4, scoped, tag = 'scoped memory for transformer_encoder_layer.9']
    %11 = vsyncpa [#allocation4], 0
    // Predicated region
    $region2: #{transformer_encoder_layer.9} parent=1 // pred_check
      _
    $region3: #{transformer_encoder_layer.9} parent=1 // pred_check_branch
      %13 = sbr.rel (0) target = $region5
    $region4: #{transformer_encoder_layer.9} parent=1 // pred_region
      _
    $region5: #{transformer_encoder_layer.9} parent=1 // pred_fallthru
      _
    // Predicated region
    $region6: #{transformer_encoder_layer.9} parent=1 // pred_check
      _
    $region7: #{transformer_encoder_layer.9} parent=1 // pred_check_branch
      %15 = sbr.rel (0) target = $region9
    $region8: #{transformer_encoder_layer.9} parent=1 // pred_region
      _
    $region9: #{transformer_encoder_layer.9} parent=1 // pred_fallthru
      _
    // Predicated region
    $region10: #{transformer_encoder_layer.9} parent=1 // pred_check
      _
    $region11: #{transformer_encoder_layer.9} parent=1 // pred_check_branch
      %17 = sbr.rel (0) target = $region13
    $region12: #{transformer_encoder_layer.9} parent=1 // pred_region
      _
    $region13: #{transformer_encoder_layer.9} parent=1 // pred_fallthru
      _
    // Predicated region
    $region14: #{transformer_encoder_layer.9} parent=1 // pred_check
      _
    $region15: #{transformer_encoder_layer.9} parent=1 // pred_check_branch
      %19 = sbr.rel (0) target = $region17
    $region16: #{transformer_encoder_layer.9} parent=1 // pred_region
      _
    $region17: #{transformer_encoder_layer.9} parent=1 // pred_fallthru
      _
    // Predicated region
    $region18: #{transformer_encoder_layer.9} parent=1 // pred_check
      _
    $region19: #{transformer_encoder_layer.9} parent=1 // pred_check_branch
      %21 = sbr.rel (0) target = $region21
    $region20: #{transformer_encoder_layer.9} parent=1 // pred_region
      _
    $region21: #{transformer_encoder_layer.9} parent=1 // pred_fallthru
      _
    // Predicated region
    $region22: #{transformer_encoder_layer.9} parent=1 // pred_check
      _
    $region23: #{transformer_encoder_layer.9} parent=1 // pred_check_branch
      %23 = sbr.rel (0) target = $region25
    $region24: #{transformer_encoder_layer.9} parent=1 // pred_region
      _
    $region25: #{transformer_encoder_layer.9} parent=1 // pred_fallthru
      _
    %p24 = scmp.eq.s32.totalorder 0, 0
    // Predicated region
    $region26: #{transformer_encoder_layer.9} parent=1 // pred_check
      %p25 = pneg %p24
    $region27: #{transformer_encoder_layer.9} parent=1 // pred_check_branch
      %27 = sbr.rel (%p25) target = $region29
    $region28: #{transformer_encoder_layer.9} parent=1 // pred_region
      %vm28 = vcmask 261120
      %29 = vst.msk [vmem:[#allocation2] sm:$0xff] %vm28, 0.0
      %30 = vst.msk [vmem:[#allocation2 + $0x8] sm:$0xff] %vm28, 0.0
    $region29: #{transformer_encoder_layer.9} parent=1 // pred_fallthru
      _
    %v31 = vld [vmem:[#allocation2] sm:$0xff]
    %v32 = vld [vmem:[#allocation2 + $0x8] sm:$0xff]
    %v33 = vld [vmem:[%s0] sm:$0xff]
    %v34 = vld [vmem:[%s0 + $0x8] sm:$0xff]
    %v35 = vld [vmem:[%s1] sm:$0xff]
    %v36 = vld [vmem:[%s1 + $0x8] sm:$0xff]
    %v37 = vld [vmem:[%s1 + $0x10] sm:$0xff]
    %v38 = vld [vmem:[%s1 + $0x18] sm:$0xff]
    %vm39 = vcmask 523264
    %v41 = vsel %vm39, %v33, 0
    %v44 = vsel %vm39, %v34, 0
    %v47 = vsel %vm39, %v35, 0
    %v50 = vsel %vm39, %v36, 0
    %v53 = vsel %vm39, %v37, 0
    %v56 = vsel %vm39, %v38, 0
    %58 = vmatpush.xpose.msra.mxu0 0.0
    %59 = vmatpush.xpose.msra.mxu0 0.0
    %60 = vmatpush.xpose.msra.mxu0 0.0
    %61 = vmatpush.xpose.msra.mxu0 0.0
    %62 = vmatpush.xpose.msra.mxu0 0.0
    %63 = vmatpush.xpose.msra.mxu0 0.0
    %64 = vmatpush.xpose.msra.mxu0 0.0
    %65 = vmatpush.xpose.msra.mxu0 0.0
    %66 = vmatpush.xpose.msra.mxu0 0.0
    %67 = vmatpush.xpose.msra.mxu0 0.0
    %68 = vmatpush.xpose.msra.mxu0 0.0
    %69 = vmatpush.xpose.msra.mxu0 0.0
    %70 = vmatpush.xpose.msra.mxu0 %v56
    %71 = vmatpush.xpose.msra.mxu0 %v53
    %72 = vmatpush.xpose.msra.mxu0 %v50
    %73 = vmatpush.xpose.msra.mxu0 %v47
    %74 = vmatmul.f32.gmra.mxu0 %v41
    %v75 = vpop.f32.mrf.mxu0
    %v76 = vadd.f32 0.0, %v75
    %77 = vmatmul.f32.gmra.mxu0 %v44
    %v78 = vpop.f32.mrf.mxu0
    %v79 = vadd.f32 0.0, %v78
    %80 = vdwg.mxu0
    %v81 = vadd.f32 %v31, %v76
    %v82 = vadd.f32 %v32, %v79
    %vm83 = vcmask 261120
    %84 = vst.msk [vmem:[#allocation2] sm:$0xff] %vm83, %v81
    %85 = vst.msk [vmem:[#allocation2 + $0x8] sm:$0xff] %vm83, %v82
    // Predicated region
    $region30: #{transformer_encoder_layer.9} parent=1 // pred_check
      %p86 = pneg %p24
    $region31: #{transformer_encoder_layer.9} parent=1 // pred_check_branch
      %88 = sbr.rel (%p86) target = $region33
    $region32: #{transformer_encoder_layer.9} parent=1 // pred_region
      %v89 = vld [vmem:[#allocation2] sm:$0xff]
      %v90 = vld [vmem:[#allocation2 + $0x8] sm:$0xff]
      %v91 = vld [vmem:[%s2] sm:$0x1]
      %v93 = vperm.slane %v91, 0
      %v95 = vadd.f32 %v89, %v93
      %v96 = vadd.f32 %v90, %v93
      %v97 = vld [vmem:[%s3] sm:$0xff]
      %v98 = vld [vmem:[%s3 + $0x8] sm:$0xff]
      %v99 = vadd.f32 %v95, %v97
      %v100 = vadd.f32 %v96, %v98
      %v101 = vsel %vm83, %v99, 0.0
      %102 = vadd.xlane.f32.xlu0 %v101
      %v103 = vpop.xlane.xlu0 %102
      %v104 = vsel %vm83, %v100, 0.0
      %105 = vadd.xlane.f32.xlu0 %v104
      %v106 = vpop.xlane.xlu0 %105
      %v107 = vrcp.pop 32.0
      %v108 = vmul.f32 32.0, %v107
      %v109 = vsub.f32 1.0, %v108
      %v110 = vmul.f32 %v107, %v109
      %v111 = vadd.f32 %v107, %v110
      %vm112 = vweird.f32 %v107
      %v113 = vsel %vm112, %v107, %v111
      %v114 = vmul.f32 %v103, %v113
      %v115 = vmul.f32 %v106, %v113
      %v116 = vsub.f32 %v99, %v114
      %v117 = vsub.f32 %v100, %v115
      %v118 = vmul.f32 %v116, %v116
      %v119 = vmul.f32 %v117, %v117
      %v120 = vsel %vm83, %v118, 0.0
      %121 = vadd.xlane.f32.xlu0 %v120
      %v122 = vpop.xlane.xlu0 %121
      %v123 = vsel %vm83, %v119, 0.0
      %124 = vadd.xlane.f32.xlu0 %v123
      %v125 = vpop.xlane.xlu0 %124
      %v126 = vmul.f32 %v122, %v113
      %v127 = vmul.f32 %v125, %v113
      %v128 = vadd.f32 %v126, 1e-05
      %v129 = vadd.f32 %v127, 1e-05
      %v130 = vrsqrt.pop %v128
      %v131 = vmul.f32 %v130, %v128
      %v132 = vmul.f32 %v131, %v130
      %v133 = vmul.f32 0.5, %v132
      %v134 = vsub.f32 1.5, %v133
      %v135 = vmul.f32 %v130, %v134
      %vm136 = vweird.f32 %v128
      %vm137 = vweird.f32 %v130
      %vm138 = vmor %vm136, %vm137
      %v139 = vsel %vm138, %v130, %v135
      %v140 = vrsqrt.pop %v129
      %v141 = vmul.f32 %v140, %v129
      %v142 = vmul.f32 %v141, %v140
      %v143 = vmul.f32 0.5, %v142
      %v144 = vsub.f32 1.5, %v143
      %v145 = vmul.f32 %v140, %v144
      %vm146 = vweird.f32 %v129
      %vm147 = vweird.f32 %v140
      %vm148 = vmor %vm146, %vm147
      %v149 = vsel %vm148, %v140, %v145
      %v150 = vmul.f32 %v116, %v139
      %v151 = vmul.f32 %v117, %v149
      %v152 = vld [vmem:[%s4] sm:$0x1]
      %v154 = vperm.slane %v152, 0
      %v156 = vmul.f32 %v150, %v154
      %v157 = vmul.f32 %v151, %v154
      %v158 = vld [vmem:[%s5] sm:$0x1]
      %v160 = vperm.slane %v158, 0
      %v162 = vadd.f32 %v156, %v160
      %v163 = vadd.f32 %v157, %v160
      %164 = vst.msk [vmem:[#allocation3] sm:$0xff] %vm83, %v162
      %165 = vst.msk [vmem:[#allocation3 + $0x8] sm:$0xff] %vm83, %v163
    $region33: #{transformer_encoder_layer.9} parent=1 // pred_fallthru
      _
    // Predicated region
    $region34: #{transformer_encoder_layer.9} parent=1 // pred_check
      _
    $region35: #{transformer_encoder_layer.9} parent=1 // pred_check_branch
      %167 = sbr.rel (0) target = $region37
    $region36: #{transformer_encoder_layer.9} parent=1 // pred_region
      %169 = vsyncadd [#allocation4], 0
      %s170 = sshll.u32 [#allocation3], 4
      %s171 = int_to_ptr.vmem [resolvable:$true] %s170
      %s172 = sshll.u32 %s6, 4
      %s173 = int_to_ptr.hbm [resolvable:$true] %s172
      %178 = dma.vmem_to_hbm [thread:$0]  %s171, 256, %s173, [#allocation4], 128, 128, 8
    $region37: #{transformer_encoder_layer.9} parent=1 // pred_fallthru
      _
    // Predicated region
    $region38: #{transformer_encoder_layer.9} parent=1 // pred_check
      _
    $region39: #{transformer_encoder_layer.9} parent=1 // pred_check_branch
      %180 = sbr.rel (0) target = $region41
    $region40: #{transformer_encoder_layer.9} parent=1 // pred_region
      %182 = dma.done [#allocation4], 256
    $region41: #{transformer_encoder_layer.9} parent=1 // pred_fallthru
      _
    %183 = vsyncpa [#allocation4], 1

// kernel: transformer_encoder_layer.6
$region0: #{transformer_encoder_layer.6}
  #allocation0 [shape = 'u32[]', space=smem, size = 0x4, offset = 0x4, fixed_abs, tag = 'smem constant byte address 0x4 - core index']
  #allocation1 [shape = 'u32[72,128]{1,0:T(1,128)}', space=vmem, size = 0x9000, scoped, tag = 'internal scratch']
  %s0 = inlined_call_operand.vmem [shape: f32[8,2,4,8], index: 0, kind: input, shape index: {}]
  %s1 = inlined_call_operand.vmem [shape: f32[8,2,4,8], index: 1, kind: input, shape index: {}]
  %s2 = inlined_call_operand.vmem [shape: f32[8,2,4,8], index: 2, kind: input, shape index: {}]
  %s3 = inlined_call_operand.vmem [shape: f32[8,2,4,8], index: 3, kind: output, shape index: {}]
  %s4 = sld [smem:[#allocation0]]
  $region205: #{transformer_encoder_layer.6} parent=0
    _
  %s6 = ssub.s32 1, %s4
  %s7 = scalar_select 0, %s6, %s4
  $region1: #{transformer_encoder_layer.6} parent=0
    #allocation2 [shape = 'u8[32768]{0}', space=vmem, size = 0x8000, scoped, tag = 'input window, operand 0']
    #allocation3 [shape = 'u8[32768]{0}', space=vmem, size = 0x8000, scoped, tag = 'input window, operand 1']
    #allocation4 [shape = 'u8[32768]{0}', space=vmem, size = 0x8000, scoped, tag = 'input window, operand 2']
    #allocation5 [shape = 'u8[32768]{0}', space=vmem, size = 0x8000, scoped, tag = 'output window, operand 0']
    loop: start=0, step=1, limit=4
    $region2: #{transformer_encoder_layer.6} parent=1 // loop_pre_header
      _
    $region3: #{transformer_encoder_layer.6} parent=1 // loop_header
      %s9 = sphi 0, %s13
      %p10 = scmp.ge.s32.totalorder %s9, 4
      %s19 = sphi 0, %s21
      %s22 = sphi 0, %s19
      %s23 = sphi 0, %s22
      %s39 = sphi 0, %s23
      %s45 = sphi 0, %s47
      %s48 = sphi 0, %s45
      %s49 = sphi 0, %s48
      %s65 = sphi 0, %s49
      %s71 = sphi 0, %s73
      %s74 = sphi 0, %s71
      %s75 = sphi 0, %s74
      %s91 = sphi 0, %s75
      %s97 = sphi 0, %s99
      %s100 = sphi 0, %s97
      %s101 = sphi 0, %s100
      %s117 = sphi 0, %s101
    $region4: #{transformer_encoder_layer.6} parent=1 // loop_header_branch
      %12 = sbr.rel (%p10) target = $region8
    $region5: #{transformer_encoder_layer.6} parent=1 // loop_body
      %s14 = ssub.s32 %s9, 1
      %s15 = ssub.s32 %s9, 2
      %s16 = sadd.s32 %s9, 1
      %s17 = ssub.s32 %s9, %s16
      %p18 = scmp.eq.s32.totalorder %s17, 0
      %s20 = sadd.s32 %s19, 1
      %s21 = scalar_select %p18, %s19, %s20
      %p24 = pneg %p18
      %p25 = scmp.eq.s32.totalorder %s9, 1
      %p26 = por %p24, %p25
      %p27 = scmp.ne.s32.totalorder %s19, %s22
      %p28 = scmp.eq.s32.totalorder %s9, 0
      %p29 = por %p27, %p28
      %p30 = scmp.ne.s32.totalorder %s19, %s22
      %p31 = scmp.eq.s32.totalorder %s14, 1
      %p32 = por %p30, %p31
      %p33 = scmp.ne.s32.totalorder %s22, %s23
      %p34 = scmp.eq.s32.totalorder %s14, 0
      %p35 = por %p33, %p34
      %p36 = scmp.ne.s32.totalorder %s22, %s23
      %p37 = scmp.eq.s32.totalorder %s15, 1
      %p38 = por %p36, %p37
      %p40 = scmp.ne.s32.totalorder %s23, %s39
      %p41 = scmp.eq.s32.totalorder %s15, 0
      %p42 = por %p40, %p41
      %s43 = ssub.s32 %s9, %s16
      %p44 = scmp.eq.s32.totalorder %s43, 0
      %s46 = sadd.s32 %s45, 1
      %s47 = scalar_select %p44, %s45, %s46
      %p50 = pneg %p44
      %p51 = scmp.eq.s32.totalorder %s9, 1
      %p52 = por %p50, %p51
      %p53 = scmp.ne.s32.totalorder %s45, %s48
      %p54 = scmp.eq.s32.totalorder %s9, 0
      %p55 = por %p53, %p54
      %p56 = scmp.ne.s32.totalorder %s45, %s48
      %p57 = scmp.eq.s32.totalorder %s14, 1
      %p58 = por %p56, %p57
      %p59 = scmp.ne.s32.totalorder %s48, %s49
      %p60 = scmp.eq.s32.totalorder %s14, 0
      %p61 = por %p59, %p60
      %p62 = scmp.ne.s32.totalorder %s48, %s49
      %p63 = scmp.eq.s32.totalorder %s15, 1
      %p64 = por %p62, %p63
      %p66 = scmp.ne.s32.totalorder %s49, %s65
      %p67 = scmp.eq.s32.totalorder %s15, 0
      %p68 = por %p66, %p67
      %s69 = ssub.s32 %s9, %s16
      %p70 = scmp.eq.s32.totalorder %s69, 0
      %s72 = sadd.s32 %s71, 1
      %s73 = scalar_select %p70, %s71, %s72
      %p76 = pneg %p70
      %p77 = scmp.eq.s32.totalorder %s9, 1
      %p78 = por %p76, %p77
      %p79 = scmp.ne.s32.totalorder %s71, %s74
      %p80 = scmp.eq.s32.totalorder %s9, 0
      %p81 = por %p79, %p80
      %p82 = scmp.ne.s32.totalorder %s71, %s74
      %p83 = scmp.eq.s32.totalorder %s14, 1
      %p84 = por %p82, %p83
      %p85 = scmp.ne.s32.totalorder %s74, %s75
      %p86 = scmp.eq.s32.totalorder %s14, 0
      %p87 = por %p85, %p86
      %p88 = scmp.ne.s32.totalorder %s74, %s75
      %p89 = scmp.eq.s32.totalorder %s15, 1
      %p90 = por %p88, %p89
      %p92 = scmp.ne.s32.totalorder %s75, %s91
      %p93 = scmp.eq.s32.totalorder %s15, 0
      %p94 = por %p92, %p93
      %s95 = ssub.s32 %s9, %s16
      %p96 = scmp.eq.s32.totalorder %s95, 0
      %s98 = sadd.s32 %s97, 1
      %s99 = scalar_select %p96, %s97, %s98
      %p102 = pneg %p96
      %p103 = scmp.eq.s32.totalorder %s9, 1
      %p104 = por %p102, %p103
      %p105 = scmp.ne.s32.totalorder %s97, %s100
      %p106 = scmp.eq.s32.totalorder %s9, 0
      %p107 = por %p105, %p106
      %p108 = scmp.ne.s32.totalorder %s97, %s100
      %p109 = scmp.eq.s32.totalorder %s14, 1
      %p110 = por %p108, %p109
      %p111 = scmp.ne.s32.totalorder %s100, %s101
      %p112 = scmp.eq.s32.totalorder %s14, 0
      %p113 = por %p111, %p112
      %p114 = scmp.ne.s32.totalorder %s100, %s101
      %p115 = scmp.eq.s32.totalorder %s15, 1
      %p116 = por %p114, %p115
      %p118 = scmp.ne.s32.totalorder %s101, %s117
      %p119 = scmp.eq.s32.totalorder %s15, 0
      %p120 = por %p118, %p119
      %p121 = scmp.le.s32.totalorder 1, %s9
      %p122 = scmp.lt.s32.totalorder %s9, 3
      %p123 = pnand %p121, %p122
      %p124 = pneg %p123
      // Predicated region
      $region9: #{transformer_encoder_layer.6} parent=5 // pred_check
        _
      $region10: #{transformer_encoder_layer.6} parent=5 // pred_check_branch
        %126 = sbr.rel (%p123) target = $region12
      $region11: #{transformer_encoder_layer.6} parent=5 // pred_region
        %s127 = ssub.s32 %s9, 1
      $region12: #{transformer_encoder_layer.6} parent=5 // pred_fallthru
        _
      %p128 = scmp.lt.s32.totalorder %s9, 2
      // Predicated region
      $region13: #{transformer_encoder_layer.6} parent=5 // pred_check
        %p129 = pneg %p128
      $region14: #{transformer_encoder_layer.6} parent=5 // pred_check_branch
        %131 = sbr.rel (%p129) target = $region16
      $region15: #{transformer_encoder_layer.6} parent=5 // pred_region
        // Predicated region
        $region17: #{transformer_encoder_layer.6} parent=15 // pred_check
          %p132 = pneg %p29
        $region18: #{transformer_encoder_layer.6} parent=15 // pred_check_branch
          %134 = sbr.rel (%p132) target = $region20
        $region19: #{transformer_encoder_layer.6} parent=15 // pred_region
          %s135 = sand.u32 %s19, 1
          %s136 = sand.u32 %s19, 1
          %s137 = smul.addr %s136, 32
          %s138 = scalar_lea.vmem [#allocation2], %s137
          %s139 = smul.addr %s9, 4
          %s140 = scalar_lea.vmem %s0, %s139
          // Predicated region
          $region21: #{transformer_encoder_layer.6} parent=19 // pred_check
            _
          $region22: #{transformer_encoder_layer.6} parent=19 // pred_check_branch
            %142 = sbr.rel (0) target = $region24
          $region23: #{transformer_encoder_layer.6} parent=19 // pred_region
            // Predicated region
            $region25: #{transformer_encoder_layer.6} parent=23 // pred_check
              _
            $region26: #{transformer_encoder_layer.6} parent=23 // pred_check_branch
              %144 = sbr.rel target = $region28
            $region27: #{transformer_encoder_layer.6} parent=23 // pred_region
              // Predicated region
              $region40: #{transformer_encoder_layer.6} parent=27 // pred_check
                _
              $region41: #{transformer_encoder_layer.6} parent=27 // pred_check_branch
                %174 = sbr.rel (0) target = $region43
              $region42: #{transformer_encoder_layer.6} parent=27 // pred_region
                loop: start=0, step=1, limit=1
                $region44: #{transformer_encoder_layer.6} parent=42 // loop_pre_header
                  _
                $region45: #{transformer_encoder_layer.6} parent=42 // loop_header
                  %s176 = sphi 0, %s180
                  %p177 = scmp.ge.s32.totalorder %s176, 1
                  %s181 = sphi %s140, %s140
                  %s182 = sphi %s138, %s138
                $region46: #{transformer_encoder_layer.6} parent=42 // loop_header_branch
                  %179 = sbr.rel (%p177) target = $region50
                $region47: #{transformer_encoder_layer.6} parent=42 // loop_body
                  _
                $region48: #{transformer_encoder_layer.6} parent=42 // loop_footer
                  %s180 = sadd.s32 1, %s176
                $region49: #{transformer_encoder_layer.6} parent=42 // loop_footer_branch
                  %175 = sbr.rel target = $region45
                $region50: #{transformer_encoder_layer.6} parent=42 // loop_exit
                  _
                %s184 = ssub.s32 16, 1
                loop: start=0, step=1, limit=1
                $region51: #{transformer_encoder_layer.6} parent=42 // loop_pre_header
                  _
                $region52: #{transformer_encoder_layer.6} parent=42 // loop_header
                  %s186 = sphi 0, %s190
                  %p187 = scmp.ge.s32.totalorder %s186, 1
                  %s191 = sphi %s140, %s140
                  %s192 = sphi %s138, %s138
                $region53: #{transformer_encoder_layer.6} parent=42 // loop_header_branch
                  %189 = sbr.rel (%p187) target = $region57
                $region54: #{transformer_encoder_layer.6} parent=42 // loop_body
                  %v193 = vld [vmem:[%s191] sm:%s184]
                  %194 = vst [vmem:[%s192] sm:%s184] %v193
                  %v195 = vld [vmem:[%s191 + $0x8] sm:%s184]
                  %196 = vst [vmem:[%s192 + $0x4] sm:%s184] %v195
                  %v197 = vld [vmem:[%s191 + $0x10] sm:%s184]
                  %198 = vst [vmem:[%s192 + $0x8] sm:%s184] %v197
                  %v199 = vld [vmem:[%s191 + $0x18] sm:%s184]
                  %200 = vst [vmem:[%s192 + $0xc] sm:%s184] %v199
                  %v201 = vld [vmem:[%s191 + $0x20] sm:%s184]
                  %202 = vst [vmem:[%s192 + $0x10] sm:%s184] %v201
                  %v203 = vld [vmem:[%s191 + $0x28] sm:%s184]
                  %204 = vst [vmem:[%s192 + $0x14] sm:%s184] %v203
                  %v205 = vld [vmem:[%s191 + $0x30] sm:%s184]
                  %206 = vst [vmem:[%s192 + $0x18] sm:%s184] %v205
                  %v207 = vld [vmem:[%s191 + $0x38] sm:%s184]
                  %208 = vst [vmem:[%s192 + $0x1c] sm:%s184] %v207
                $region55: #{transformer_encoder_layer.6} parent=42 // loop_footer
                  %s190 = sadd.s32 1, %s186
                $region56: #{transformer_encoder_layer.6} parent=42 // loop_footer_branch
                  %185 = sbr.rel target = $region52
                $region57: #{transformer_encoder_layer.6} parent=42 // loop_exit
                  _
              $region43: #{transformer_encoder_layer.6} parent=27 // pred_fallthru
                _
            $region28: #{transformer_encoder_layer.6} parent=23 // pred_fallthru
              _
            // Predicated region
            $region29: #{transformer_encoder_layer.6} parent=23 // pred_check
              _
            $region30: #{transformer_encoder_layer.6} parent=23 // pred_check_branch
              %146 = sbr.rel (0) target = $region32
            $region31: #{transformer_encoder_layer.6} parent=23 // pred_region
              %s148 = ssub.s32 16, 1
              loop: start=0, step=1, limit=1
              $region33: #{transformer_encoder_layer.6} parent=31 // loop_pre_header
                _
              $region34: #{transformer_encoder_layer.6} parent=31 // loop_header
                %s150 = sphi 0, %s154
                %p151 = scmp.ge.s32.totalorder %s150, 1
                %s155 = sphi %s140, %s140
                %s156 = sphi %s138, %s138
              $region35: #{transformer_encoder_layer.6} parent=31 // loop_header_branch
                %153 = sbr.rel (%p151) target = $region39
              $region36: #{transformer_encoder_layer.6} parent=31 // loop_body
                %v157 = vld [vmem:[%s155] sm:%s148]
                %158 = vst [vmem:[%s156] sm:%s148] %v157
                %v159 = vld [vmem:[%s155 + $0x8] sm:%s148]
                %160 = vst [vmem:[%s156 + $0x4] sm:%s148] %v159
                %v161 = vld [vmem:[%s155 + $0x10] sm:%s148]
                %162 = vst [vmem:[%s156 + $0x8] sm:%s148] %v161
                %v163 = vld [vmem:[%s155 + $0x18] sm:%s148]
                %164 = vst [vmem:[%s156 + $0xc] sm:%s148] %v163
                %v165 = vld [vmem:[%s155 + $0x20] sm:%s148]
                %166 = vst [vmem:[%s156 + $0x10] sm:%s148] %v165
                %v167 = vld [vmem:[%s155 + $0x28] sm:%s148]
                %168 = vst [vmem:[%s156 + $0x14] sm:%s148] %v167
                %v169 = vld [vmem:[%s155 + $0x30] sm:%s148]
                %170 = vst [vmem:[%s156 + $0x18] sm:%s148] %v169
                %v171 = vld [vmem:[%s155 + $0x38] sm:%s148]
                %172 = vst [vmem:[%s156 + $0x1c] sm:%s148] %v171
              $region37: #{transformer_encoder_layer.6} parent=31 // loop_footer
                %s154 = sadd.s32 1, %s150
              $region38: #{transformer_encoder_layer.6} parent=31 // loop_footer_branch
                %149 = sbr.rel target = $region34
              $region39: #{transformer_encoder_layer.6} parent=31 // loop_exit
                _
            $region32: #{transformer_encoder_layer.6} parent=23 // pred_fallthru
              _
          $region24: #{transformer_encoder_layer.6} parent=19 // pred_fallthru
            _
          %209 = vnop
        $region20: #{transformer_encoder_layer.6} parent=15 // pred_fallthru
          _
        // Predicated region
        $region58: #{transformer_encoder_layer.6} parent=15 // pred_check
          %p210 = pneg %p55
        $region59: #{transformer_encoder_layer.6} parent=15 // pred_check_branch
          %212 = sbr.rel (%p210) target = $region61
        $region60: #{transformer_encoder_layer.6} parent=15 // pred_region
          %s213 = sand.u32 %s45, 1
          %s214 = sand.u32 %s45, 1
          %s215 = smul.addr %s214, 32
          %s216 = scalar_lea.vmem [#allocation3], %s215
          %s217 = smul.addr %s9, 4
          %s218 = scalar_lea.vmem %s1, %s217
          // Predicated region
          $region62: #{transformer_encoder_layer.6} parent=60 // pred_check
            _
          $region63: #{transformer_encoder_layer.6} parent=60 // pred_check_branch
            %220 = sbr.rel (0) target = $region65
          $region64: #{transformer_encoder_layer.6} parent=60 // pred_region
            // Predicated region
            $region66: #{transformer_encoder_layer.6} parent=64 // pred_check
              _
            $region67: #{transformer_encoder_layer.6} parent=64 // pred_check_branch
              %222 = sbr.rel target = $region69
            $region68: #{transformer_encoder_layer.6} parent=64 // pred_region
              // Predicated region
              $region81: #{transformer_encoder_layer.6} parent=68 // pred_check
                _
              $region82: #{transformer_encoder_layer.6} parent=68 // pred_check_branch
                %252 = sbr.rel (0) target = $region84
              $region83: #{transformer_encoder_layer.6} parent=68 // pred_region
                loop: start=0, step=1, limit=1
                $region85: #{transformer_encoder_layer.6} parent=83 // loop_pre_header
                  _
                $region86: #{transformer_encoder_layer.6} parent=83 // loop_header
                  %s254 = sphi 0, %s258
                  %p255 = scmp.ge.s32.totalorder %s254, 1
                  %s259 = sphi %s218, %s218
                  %s260 = sphi %s216, %s216
                $region87: #{transformer_encoder_layer.6} parent=83 // loop_header_branch
                  %257 = sbr.rel (%p255) target = $region91
                $region88: #{transformer_encoder_layer.6} parent=83 // loop_body
                  _
                $region89: #{transformer_encoder_layer.6} parent=83 // loop_footer
                  %s258 = sadd.s32 1, %s254
                $region90: #{transformer_encoder_layer.6} parent=83 // loop_footer_branch
                  %253 = sbr.rel target = $region86
                $region91: #{transformer_encoder_layer.6} parent=83 // loop_exit
                  _
                %s262 = ssub.s32 16, 1
                loop: start=0, step=1, limit=1
                $region92: #{transformer_encoder_layer.6} parent=83 // loop_pre_header
                  _
                $region93: #{transformer_encoder_layer.6} parent=83 // loop_header
                  %s264 = sphi 0, %s268
                  %p265 = scmp.ge.s32.totalorder %s264, 1
                  %s269 = sphi %s218, %s218
                  %s270 = sphi %s216, %s216
                $region94: #{transformer_encoder_layer.6} parent=83 // loop_header_branch
                  %267 = sbr.rel (%p265) target = $region98
                $region95: #{transformer_encoder_layer.6} parent=83 // loop_body
                  %v271 = vld [vmem:[%s269] sm:%s262]
                  %272 = vst [vmem:[%s270] sm:%s262] %v271
                  %v273 = vld [vmem:[%s269 + $0x8] sm:%s262]
                  %274 = vst [vmem:[%s270 + $0x4] sm:%s262] %v273
                  %v275 = vld [vmem:[%s269 + $0x10] sm:%s262]
                  %276 = vst [vmem:[%s270 + $0x8] sm:%s262] %v275
                  %v277 = vld [vmem:[%s269 + $0x18] sm:%s262]
                  %278 = vst [vmem:[%s270 + $0xc] sm:%s262] %v277
                  %v279 = vld [vmem:[%s269 + $0x20] sm:%s262]
                  %280 = vst [vmem:[%s270 + $0x10] sm:%s262] %v279
                  %v281 = vld [vmem:[%s269 + $0x28] sm:%s262]
                  %282 = vst [vmem:[%s270 + $0x14] sm:%s262] %v281
                  %v283 = vld [vmem:[%s269 + $0x30] sm:%s262]
                  %284 = vst [vmem:[%s270 + $0x18] sm:%s262] %v283
                  %v285 = vld [vmem:[%s269 + $0x38] sm:%s262]
                  %286 = vst [vmem:[%s270 + $0x1c] sm:%s262] %v285
                $region96: #{transformer_encoder_layer.6} parent=83 // loop_footer
                  %s268 = sadd.s32 1, %s264
                $region97: #{transformer_encoder_layer.6} parent=83 // loop_footer_branch
                  %263 = sbr.rel target = $region93
                $region98: #{transformer_encoder_layer.6} parent=83 // loop_exit
                  _
              $region84: #{transformer_encoder_layer.6} parent=68 // pred_fallthru
                _
            $region69: #{transformer_encoder_layer.6} parent=64 // pred_fallthru
              _
            // Predicated region
            $region70: #{transformer_encoder_layer.6} parent=64 // pred_check
              _
            $region71: #{transformer_encoder_layer.6} parent=64 // pred_check_branch
              %224 = sbr.rel (0) target = $region73
            $region72: #{transformer_encoder_layer.6} parent=64 // pred_region
              %s226 = ssub.s32 16, 1
              loop: start=0, step=1, limit=1
              $region74: #{transformer_encoder_layer.6} parent=72 // loop_pre_header
                _
              $region75: #{transformer_encoder_layer.6} parent=72 // loop_header
                %s228 = sphi 0, %s232
                %p229 = scmp.ge.s32.totalorder %s228, 1
                %s233 = sphi %s218, %s218
                %s234 = sphi %s216, %s216
              $region76: #{transformer_encoder_layer.6} parent=72 // loop_header_branch
                %231 = sbr.rel (%p229) target = $region80
              $region77: #{transformer_encoder_layer.6} parent=72 // loop_body
                %v235 = vld [vmem:[%s233] sm:%s226]
                %236 = vst [vmem:[%s234] sm:%s226] %v235
                %v237 = vld [vmem:[%s233 + $0x8] sm:%s226]
                %238 = vst [vmem:[%s234 + $0x4] sm:%s226] %v237
                %v239 = vld [vmem:[%s233 + $0x10] sm:%s226]
                %240 = vst [vmem:[%s234 + $0x8] sm:%s226] %v239
                %v241 = vld [vmem:[%s233 + $0x18] sm:%s226]
                %242 = vst [vmem:[%s234 + $0xc] sm:%s226] %v241
                %v243 = vld [vmem:[%s233 + $0x20] sm:%s226]
                %244 = vst [vmem:[%s234 + $0x10] sm:%s226] %v243
                %v245 = vld [vmem:[%s233 + $0x28] sm:%s226]
                %246 = vst [vmem:[%s234 + $0x14] sm:%s226] %v245
                %v247 = vld [vmem:[%s233 + $0x30] sm:%s226]
                %248 = vst [vmem:[%s234 + $0x18] sm:%s226] %v247
                %v249 = vld [vmem:[%s233 + $0x38] sm:%s226]
                %250 = vst [vmem:[%s234 + $0x1c] sm:%s226] %v249
              $region78: #{transformer_encoder_layer.6} parent=72 // loop_footer
                %s232 = sadd.s32 1, %s228
              $region79: #{transformer_encoder_layer.6} parent=72 // loop_footer_branch
                %227 = sbr.rel target = $region75
              $region80: #{transformer_encoder_layer.6} parent=72 // loop_exit
                _
            $region73: #{transformer_encoder_layer.6} parent=64 // pred_fallthru
              _
          $region65: #{transformer_encoder_layer.6} parent=60 // pred_fallthru
            _
          %287 = vnop
        $region61: #{transformer_encoder_layer.6} parent=15 // pred_fallthru
          _
        // Predicated region
        $region99: #{transformer_encoder_layer.6} parent=15 // pred_check
          %p288 = pneg %p81
        $region100: #{transformer_encoder_layer.6} parent=15 // pred_check_branch
          %290 = sbr.rel (%p288) target = $region102
        $region101: #{transformer_encoder_layer.6} parent=15 // pred_region
          %s291 = sand.u32 %s71, 1
          %s292 = sand.u32 %s71, 1
          %s293 = smul.addr %s292, 32
          %s294 = scalar_lea.vmem [#allocation4], %s293
          %s295 = smul.addr %s9, 4
          %s296 = scalar_lea.vmem %s2, %s295
          // Predicated region
          $region103: #{transformer_encoder_layer.6} parent=101 // pred_check
            _
          $region104: #{transformer_encoder_layer.6} parent=101 // pred_check_branch
            %298 = sbr.rel (0) target = $region106
          $region105: #{transformer_encoder_layer.6} parent=101 // pred_region
            // Predicated region
            $region107: #{transformer_encoder_layer.6} parent=105 // pred_check
              _
            $region108: #{transformer_encoder_layer.6} parent=105 // pred_check_branch
              %300 = sbr.rel target = $region110
            $region109: #{transformer_encoder_layer.6} parent=105 // pred_region
              // Predicated region
              $region122: #{transformer_encoder_layer.6} parent=109 // pred_check
                _
              $region123: #{transformer_encoder_layer.6} parent=109 // pred_check_branch
                %330 = sbr.rel (0) target = $region125
              $region124: #{transformer_encoder_layer.6} parent=109 // pred_region
                loop: start=0, step=1, limit=1
                $region126: #{transformer_encoder_layer.6} parent=124 // loop_pre_header
                  _
                $region127: #{transformer_encoder_layer.6} parent=124 // loop_header
                  %s332 = sphi 0, %s336
                  %p333 = scmp.ge.s32.totalorder %s332, 1
                  %s337 = sphi %s296, %s296
                  %s338 = sphi %s294, %s294
                $region128: #{transformer_encoder_layer.6} parent=124 // loop_header_branch
                  %335 = sbr.rel (%p333) target = $region132
                $region129: #{transformer_encoder_layer.6} parent=124 // loop_body
                  _
                $region130: #{transformer_encoder_layer.6} parent=124 // loop_footer
                  %s336 = sadd.s32 1, %s332
                $region131: #{transformer_encoder_layer.6} parent=124 // loop_footer_branch
                  %331 = sbr.rel target = $region127
                $region132: #{transformer_encoder_layer.6} parent=124 // loop_exit
                  _
                %s340 = ssub.s32 16, 1
                loop: start=0, step=1, limit=1
                $region133: #{transformer_encoder_layer.6} parent=124 // loop_pre_header
                  _
                $region134: #{transformer_encoder_layer.6} parent=124 // loop_header
                  %s342 = sphi 0, %s346
                  %p343 = scmp.ge.s32.totalorder %s342, 1
                  %s347 = sphi %s296, %s296
                  %s348 = sphi %s294, %s294
                $region135: #{transformer_encoder_layer.6} parent=124 // loop_header_branch
                  %345 = sbr.rel (%p343) target = $region139
                $region136: #{transformer_encoder_layer.6} parent=124 // loop_body
                  %v349 = vld [vmem:[%s347] sm:%s340]
                  %350 = vst [vmem:[%s348] sm:%s340] %v349
                  %v351 = vld [vmem:[%s347 + $0x8] sm:%s340]
                  %352 = vst [vmem:[%s348 + $0x4] sm:%s340] %v351
                  %v353 = vld [vmem:[%s347 + $0x10] sm:%s340]
                  %354 = vst [vmem:[%s348 + $0x8] sm:%s340] %v353
                  %v355 = vld [vmem:[%s347 + $0x18] sm:%s340]
                  %356 = vst [vmem:[%s348 + $0xc] sm:%s340] %v355
                  %v357 = vld [vmem:[%s347 + $0x20] sm:%s340]
                  %358 = vst [vmem:[%s348 + $0x10] sm:%s340] %v357
                  %v359 = vld [vmem:[%s347 + $0x28] sm:%s340]
                  %360 = vst [vmem:[%s348 + $0x14] sm:%s340] %v359
                  %v361 = vld [vmem:[%s347 + $0x30] sm:%s340]
                  %362 = vst [vmem:[%s348 + $0x18] sm:%s340] %v361
                  %v363 = vld [vmem:[%s347 + $0x38] sm:%s340]
                  %364 = vst [vmem:[%s348 + $0x1c] sm:%s340] %v363
                $region137: #{transformer_encoder_layer.6} parent=124 // loop_footer
                  %s346 = sadd.s32 1, %s342
                $region138: #{transformer_encoder_layer.6} parent=124 // loop_footer_branch
                  %341 = sbr.rel target = $region134
                $region139: #{transformer_encoder_layer.6} parent=124 // loop_exit
                  _
              $region125: #{transformer_encoder_layer.6} parent=109 // pred_fallthru
                _
            $region110: #{transformer_encoder_layer.6} parent=105 // pred_fallthru
              _
            // Predicated region
            $region111: #{transformer_encoder_layer.6} parent=105 // pred_check
              _
            $region112: #{transformer_encoder_layer.6} parent=105 // pred_check_branch
              %302 = sbr.rel (0) target = $region114
            $region113: #{transformer_encoder_layer.6} parent=105 // pred_region
              %s304 = ssub.s32 16, 1
              loop: start=0, step=1, limit=1
              $region115: #{transformer_encoder_layer.6} parent=113 // loop_pre_header
                _
              $region116: #{transformer_encoder_layer.6} parent=113 // loop_header
                %s306 = sphi 0, %s310
                %p307 = scmp.ge.s32.totalorder %s306, 1
                %s311 = sphi %s296, %s296
                %s312 = sphi %s294, %s294
              $region117: #{transformer_encoder_layer.6} parent=113 // loop_header_branch
                %309 = sbr.rel (%p307) target = $region121
              $region118: #{transformer_encoder_layer.6} parent=113 // loop_body
                %v313 = vld [vmem:[%s311] sm:%s304]
                %314 = vst [vmem:[%s312] sm:%s304] %v313
                %v315 = vld [vmem:[%s311 + $0x8] sm:%s304]
                %316 = vst [vmem:[%s312 + $0x4] sm:%s304] %v315
                %v317 = vld [vmem:[%s311 + $0x10] sm:%s304]
                %318 = vst [vmem:[%s312 + $0x8] sm:%s304] %v317
                %v319 = vld [vmem:[%s311 + $0x18] sm:%s304]
                %320 = vst [vmem:[%s312 + $0xc] sm:%s304] %v319
                %v321 = vld [vmem:[%s311 + $0x20] sm:%s304]
                %322 = vst [vmem:[%s312 + $0x10] sm:%s304] %v321
                %v323 = vld [vmem:[%s311 + $0x28] sm:%s304]
                %324 = vst [vmem:[%s312 + $0x14] sm:%s304] %v323
                %v325 = vld [vmem:[%s311 + $0x30] sm:%s304]
                %326 = vst [vmem:[%s312 + $0x18] sm:%s304] %v325
                %v327 = vld [vmem:[%s311 + $0x38] sm:%s304]
                %328 = vst [vmem:[%s312 + $0x1c] sm:%s304] %v327
              $region119: #{transformer_encoder_layer.6} parent=113 // loop_footer
                %s310 = sadd.s32 1, %s306
              $region120: #{transformer_encoder_layer.6} parent=113 // loop_footer_branch
                %305 = sbr.rel target = $region116
              $region121: #{transformer_encoder_layer.6} parent=113 // loop_exit
                _
            $region114: #{transformer_encoder_layer.6} parent=105 // pred_fallthru
              _
          $region106: #{transformer_encoder_layer.6} parent=101 // pred_fallthru
            _
          %365 = vnop
        $region102: #{transformer_encoder_layer.6} parent=15 // pred_fallthru
          _
      $region16: #{transformer_encoder_layer.6} parent=5 // pred_fallthru
        _
      %p366 = scmp.le.s32.totalorder 1, %s9
      %p367 = scmp.lt.s32.totalorder %s9, 3
      %p368 = pnand %p366, %p367
      %p369 = pneg %p368
      // Predicated region
      $region140: #{transformer_encoder_layer.6} parent=5 // pred_check
        _
      $region141: #{transformer_encoder_layer.6} parent=5 // pred_check_branch
        %371 = sbr.rel (%p368) target = $region143
      $region142: #{transformer_encoder_layer.6} parent=5 // pred_region
        %s372 = ssub.s32 %s9, 1
        %s373 = sand.u32 %s22, 1
        %s374 = sand.u32 %s22, 1
        %s375 = smul.addr %s374, 32
        %s376 = scalar_lea.vmem [#allocation2], %s375
        // Predicated region
        $region144: #{transformer_encoder_layer.6} parent=142 // pred_check
          %p377 = pneg %p35
        $region145: #{transformer_encoder_layer.6} parent=142 // pred_check_branch
          %379 = sbr.rel (%p377) target = $region147
        $region146: #{transformer_encoder_layer.6} parent=142 // pred_region
          _
        $region147: #{transformer_encoder_layer.6} parent=142 // pred_fallthru
          _
        %s380 = sand.u32 %s48, 1
        %s381 = sand.u32 %s48, 1
        %s382 = smul.addr %s381, 32
        %s383 = scalar_lea.vmem [#allocation3], %s382
        // Predicated region
        $region148: #{transformer_encoder_layer.6} parent=142 // pred_check
          %p384 = pneg %p61
        $region149: #{transformer_encoder_layer.6} parent=142 // pred_check_branch
          %386 = sbr.rel (%p384) target = $region151
        $region150: #{transformer_encoder_layer.6} parent=142 // pred_region
          _
        $region151: #{transformer_encoder_layer.6} parent=142 // pred_fallthru
          _
        %s387 = sand.u32 %s74, 1
        %s388 = sand.u32 %s74, 1
        %s389 = smul.addr %s388, 32
        %s390 = scalar_lea.vmem [#allocation4], %s389
        // Predicated region
        $region152: #{transformer_encoder_layer.6} parent=142 // pred_check
          %p391 = pneg %p87
        $region153: #{transformer_encoder_layer.6} parent=142 // pred_check_branch
          %393 = sbr.rel (%p391) target = $region155
        $region154: #{transformer_encoder_layer.6} parent=142 // pred_region
          _
        $region155: #{transformer_encoder_layer.6} parent=142 // pred_fallthru
          _
        %s394 = sand.u32 %s22, 1
        %s395 = sand.u32 %s22, 1
        %s396 = smul.addr %s395, 32
        %s397 = scalar_lea.vmem [#allocation2], %s396
        %p398 = pneg %p35
        %p399 = pneg %p32
        %s400 = sand.u32 %s48, 1
        %s401 = sand.u32 %s48, 1
        %s402 = smul.addr %s401, 32
        %s403 = scalar_lea.vmem [#allocation3], %s402
        %p404 = pneg %p61
        %p405 = pneg %p58
        %s406 = sand.u32 %s74, 1
        %s407 = sand.u32 %s74, 1
        %s408 = smul.addr %s407, 32
        %s409 = scalar_lea.vmem [#allocation4], %s408
        %p410 = pneg %p87
        %p411 = pneg %p84
        %p412 = pneg %p113
        %p413 = pneg %p110
        %s414 = sand.u32 %s100, 1
        %s415 = sand.u32 %s100, 1
        %s416 = smul.addr %s415, 32
        %s417 = scalar_lea.vmem [#allocation5], %s416
        %v418 = vld [vmem:[%s376] sm:$0x1]
        %v419 = vld [vmem:[%s376 + $0x4] sm:$0x1]
        %v420 = vld [vmem:[%s376 + $0x8] sm:$0x1]
        %v421 = vld [vmem:[%s376 + $0xc] sm:$0x1]
        %v422 = vld [vmem:[%s376 + $0x10] sm:$0x1]
        %v423 = vld [vmem:[%s376 + $0x14] sm:$0x1]
        %v424 = vld [vmem:[%s376 + $0x18] sm:$0x1]
        %v425 = vld [vmem:[%s376 + $0x1c] sm:$0x1]
        %v426 = vld [vmem:[%s383] sm:$0x1]
        %v427 = vld [vmem:[%s383 + $0x4] sm:$0x1]
        %v428 = vld [vmem:[%s383 + $0x8] sm:$0x1]
        %v429 = vld [vmem:[%s383 + $0xc] sm:$0x1]
        %v430 = vld [vmem:[%s383 + $0x10] sm:$0x1]
        %v431 = vld [vmem:[%s383 + $0x14] sm:$0x1]
        %v432 = vld [vmem:[%s383 + $0x18] sm:$0x1]
        %v433 = vld [vmem:[%s383 + $0x1c] sm:$0x1]
        %v434 = vld [vmem:[%s390] sm:$0x1]
        %v435 = vld [vmem:[%s390 + $0x4] sm:$0x1]
        %v436 = vld [vmem:[%s390 + $0x8] sm:$0x1]
        %v437 = vld [vmem:[%s390 + $0xc] sm:$0x1]
        %v438 = vld [vmem:[%s390 + $0x10] sm:$0x1]
        %v439 = vld [vmem:[%s390 + $0x14] sm:$0x1]
        %v440 = vld [vmem:[%s390 + $0x18] sm:$0x1]
        %v441 = vld [vmem:[%s390 + $0x1c] sm:$0x1]
        %v450 = vrot.slane %v419, 7
        %vm451 = vcmask 1041409
        %v452 = vsel %vm451, %v450, %v418
        %v453 = vrot.slane %v420, 6
        %vm454 = vcmask 1042434
        %v455 = vsel %vm454, %v453, %v452
        %v456 = vrot.slane %v421, 5
        %vm457 = vcmask 1043459
        %v458 = vsel %vm457, %v456, %v455
        %v459 = vrot.slane %v422, 4
        %vm460 = vcmask 1044484
        %v461 = vsel %vm460, %v459, %v458
        %v462 = vrot.slane %v423, 3
        %vm463 = vcmask 1045509
        %v464 = vsel %vm463, %v462, %v461
        %v465 = vrot.slane %v424, 2
        %vm466 = vcmask 1046534
        %v467 = vsel %vm466, %v465, %v464
        %v468 = vrot.slane %v425, 1
        %vm469 = vcmask 1047559
        %v470 = vsel %vm469, %v468, %v467
        %v479 = vrot.slane %v427, 7
        %v480 = vsel %vm451, %v479, %v426
        %v481 = vrot.slane %v428, 6
        %v482 = vsel %vm454, %v481, %v480
        %v483 = vrot.slane %v429, 5
        %v484 = vsel %vm457, %v483, %v482
        %v485 = vrot.slane %v430, 4
        %v486 = vsel %vm460, %v485, %v484
        %v487 = vrot.slane %v431, 3
        %v488 = vsel %vm463, %v487, %v486
        %v489 = vrot.slane %v432, 2
        %v490 = vsel %vm466, %v489, %v488
        %v491 = vrot.slane %v433, 1
        %v492 = vsel %vm469, %v491, %v490
        %vm493 = vcmask 64512
        %v494 = vsel %vm493, %v470, 0
        %v496 = vsel %vm493, %v492, 0
        %498 = vmatpush.xpose.msra.mxu0 0.0
        %499 = vmatpush.xpose.msra.mxu0 0.0
        %500 = vmatpush.xpose.msra.mxu0 0.0
        %501 = vmatpush.xpose.msra.mxu0 0.0
        %502 = vmatpush.xpose.msra.mxu0 0.0
        %503 = vmatpush.xpose.msra.mxu0 0.0
        %504 = vmatpush.xpose.msra.mxu0 0.0
        %505 = vmatpush.xpose.msra.mxu0 0.0
        %506 = vmatpush.xpose.msra.mxu0 0.0
        %507 = vmatpush.xpose.msra.mxu0 0.0
        %508 = vmatpush.xpose.msra.mxu0 0.0
        %509 = vmatpush.xpose.msra.mxu0 0.0
        %510 = vmatpush.xpose.msra.mxu0 0.0
        %511 = vmatpush.xpose.msra.mxu0 0.0
        %512 = vmatpush.xpose.msra.mxu0 0.0
        %513 = vmatpush.xpose.msra.mxu0 %v496
        %514 = vmatmul.f32.gmra.mxu0 %v494
        %v515 = vpop.f32.mrf.mxu0
        %v516 = vadd.f32 0.0, %v515
        %517 = vdwg.mxu0
        %v518 = vsel %vm493, %v516, -inf
        %519 = vmax.xlane.f32.xlu0 %v518
        %v520 = vpop.xlane.xlu0 %519
        %v521 = vsub.f32 %v516, %v520
        %v522 = vmul.f32 %v521, 1.442695
        %v523 = vpow.pop %v522
        %v524 = vsel %vm493, %v523, 0.0
        %525 = vadd.xlane.f32.xlu0 %v524
        %v526 = vpop.xlane.xlu0 %525
        %v527 = vrcp.pop %v526
        %v528 = vmul.f32 %v523, %v527
        %v537 = vrot.slane %v435, 7
        %v538 = vsel %vm451, %v537, %v434
        %v539 = vrot.slane %v436, 6
        %v540 = vsel %vm454, %v539, %v538
        %v541 = vrot.slane %v437, 5
        %v542 = vsel %vm457, %v541, %v540
        %v543 = vrot.slane %v438, 4
        %v544 = vsel %vm460, %v543, %v542
        %v545 = vrot.slane %v439, 3
        %v546 = vsel %vm463, %v545, %v544
        %v547 = vrot.slane %v440, 2
        %v548 = vsel %vm466, %v547, %v546
        %v549 = vrot.slane %v441, 1
        %v550 = vsel %vm469, %v549, %v548
        %v553 = vsel %vm493, %v528, 0
        %555 = vmatpush.msra.mxu0 0.0
        %556 = vmatpush.msra.mxu0 0.0
        %557 = vmatpush.msra.mxu0 0.0
        %558 = vmatpush.msra.mxu0 0.0
        %559 = vmatpush.msra.mxu0 0.0
        %560 = vmatpush.msra.mxu0 0.0
        %561 = vmatpush.msra.mxu0 0.0
        %562 = vmatpush.msra.mxu0 0.0
        %563 = vmatpush.msra.mxu0 0.0
        %564 = vmatpush.msra.mxu0 0.0
        %565 = vmatpush.msra.mxu0 0.0
        %566 = vmatpush.msra.mxu0 0.0
        %567 = vmatpush.msra.mxu0 0.0
        %568 = vmatpush.msra.mxu0 0.0
        %569 = vmatpush.msra.mxu0 0.0
        %570 = vmatpush.msra.mxu0 %v550
        %571 = vmatmul.f32.gmra.mxu0 %v553
        %v572 = vpop.f32.mrf.mxu0
        %v573 = vadd.f32 0.0, %v572
        %574 = vdwg.mxu0
        %v576 = vrot.slane %v573, 1
        %v577 = vrot.slane %v573, 2
        %v578 = vrot.slane %v573, 3
        %v579 = vrot.slane %v573, 4
        %v580 = vrot.slane %v573, 5
        %v581 = vrot.slane %v573, 6
        %v582 = vrot.slane %v573, 7
        %vm590 = vcmask 57344
        %591 = vst.msk [vmem:[%s417] sm:$0x1] %vm590, %v573
        %592 = vst.msk [vmem:[%s417 + $0x4] sm:$0x1] %vm590, %v576
        %593 = vst.msk [vmem:[%s417 + $0x8] sm:$0x1] %vm590, %v577
        %594 = vst.msk [vmem:[%s417 + $0xc] sm:$0x1] %vm590, %v578
        %595 = vst.msk [vmem:[%s417 + $0x10] sm:$0x1] %vm590, %v579
        %596 = vst.msk [vmem:[%s417 + $0x14] sm:$0x1] %vm590, %v580
        %597 = vst.msk [vmem:[%s417 + $0x18] sm:$0x1] %vm590, %v581
        %598 = vst.msk [vmem:[%s417 + $0x1c] sm:$0x1] %vm590, %v582
        %v599 = vld [vmem:[%s376 + $0x1] sm:$0x1]
        %v600 = vld [vmem:[%s376 + $0x5] sm:$0x1]
        %v601 = vld [vmem:[%s376 + $0x9] sm:$0x1]
        %v602 = vld [vmem:[%s376 + $0xd] sm:$0x1]
        %v603 = vld [vmem:[%s376 + $0x11] sm:$0x1]
        %v604 = vld [vmem:[%s376 + $0x15] sm:$0x1]
        %v605 = vld [vmem:[%s376 + $0x19] sm:$0x1]
        %v606 = vld [vmem:[%s376 + $0x1d] sm:$0x1]
        %v607 = vld [vmem:[%s383 + $0x1] sm:$0x1]
        %v608 = vld [vmem:[%s383 + $0x5] sm:$0x1]
        %v609 = vld [vmem:[%s383 + $0x9] sm:$0x1]
        %v610 = vld [vmem:[%s383 + $0xd] sm:$0x1]
        %v611 = vld [vmem:[%s383 + $0x11] sm:$0x1]
        %v612 = vld [vmem:[%s383 + $0x15] sm:$0x1]
        %v613 = vld [vmem:[%s383 + $0x19] sm:$0x1]
        %v614 = vld [vmem:[%s383 + $0x1d] sm:$0x1]
        %v615 = vld [vmem:[%s390 + $0x1] sm:$0x1]
        %v616 = vld [vmem:[%s390 + $0x5] sm:$0x1]
        %v617 = vld [vmem:[%s390 + $0x9] sm:$0x1]
        %v618 = vld [vmem:[%s390 + $0xd] sm:$0x1]
        %v619 = vld [vmem:[%s390 + $0x11] sm:$0x1]
        %v620 = vld [vmem:[%s390 + $0x15] sm:$0x1]
        %v621 = vld [vmem:[%s390 + $0x19] sm:$0x1]
        %v622 = vld [vmem:[%s390 + $0x1d] sm:$0x1]
        %v631 = vrot.slane %v600, 7
        %v632 = vsel %vm451, %v631, %v599
        %v633 = vrot.slane %v601, 6
        %v634 = vsel %vm454, %v633, %v632
        %v635 = vrot.slane %v602, 5
        %v636 = vsel %vm457, %v635, %v634
        %v637 = vrot.slane %v603, 4
        %v638 = vsel %vm460, %v637, %v636
        %v639 = vrot.slane %v604, 3
        %v640 = vsel %vm463, %v639, %v638
        %v641 = vrot.slane %v605, 2
        %v642 = vsel %vm466, %v641, %v640
        %v643 = vrot.slane %v606, 1
        %v644 = vsel %vm469, %v643, %v642
        %v653 = vrot.slane %v608, 7
        %v654 = vsel %vm451, %v653, %v607
        %v655 = vrot.slane %v609, 6
        %v656 = vsel %vm454, %v655, %v654
        %v657 = vrot.slane %v610, 5
        %v658 = vsel %vm457, %v657, %v656
        %v659 = vrot.slane %v611, 4
        %v660 = vsel %vm460, %v659, %v658
        %v661 = vrot.slane %v612, 3
        %v662 = vsel %vm463, %v661, %v660
        %v663 = vrot.slane %v613, 2
        %v664 = vsel %vm466, %v663, %v662
        %v665 = vrot.slane %v614, 1
        %v666 = vsel %vm469, %v665, %v664
        %v667 = vsel %vm493, %v644, 0
        %v669 = vsel %vm493, %v666, 0
        %671 = vmatpush.xpose.msra.mxu0 0.0
        %672 = vmatpush.xpose.msra.mxu0 0.0
        %673 = vmatpush.xpose.msra.mxu0 0.0
        %674 = vmatpush.xpose.msra.mxu0 0.0
        %675 = vmatpush.xpose.msra.mxu0 0.0
        %676 = vmatpush.xpose.msra.mxu0 0.0
        %677 = vmatpush.xpose.msra.mxu0 0.0
        %678 = vmatpush.xpose.msra.mxu0 0.0
        %679 = vmatpush.xpose.msra.mxu0 0.0
        %680 = vmatpush.xpose.msra.mxu0 0.0
        %681 = vmatpush.xpose.msra.mxu0 0.0
        %682 = vmatpush.xpose.msra.mxu0 0.0
        %683 = vmatpush.xpose.msra.mxu0 0.0
        %684 = vmatpush.xpose.msra.mxu0 0.0
        %685 = vmatpush.xpose.msra.mxu0 0.0
        %686 = vmatpush.xpose.msra.mxu0 %v669
        %687 = vmatmul.f32.gmra.mxu0 %v667
        %v688 = vpop.f32.mrf.mxu0
        %v689 = vadd.f32 0.0, %v688
        %690 = vdwg.mxu0
        %v691 = vsel %vm493, %v689, -inf
        %692 = vmax.xlane.f32.xlu0 %v691
        %v693 = vpop.xlane.xlu0 %692
        %v694 = vsub.f32 %v689, %v693
        %v695 = vmul.f32 %v694, 1.442695
        %v696 = vpow.pop %v695
        %v697 = vsel %vm493, %v696, 0.0
        %698 = vadd.xlane.f32.xlu0 %v697
        %v699 = vpop.xlane.xlu0 %698
        %v700 = vrcp.pop %v699
        %v701 = vmul.f32 %v696, %v700
        %v710 = vrot.slane %v616, 7
        %v711 = vsel %vm451, %v710, %v615
        %v712 = vrot.slane %v617, 6
        %v713 = vsel %vm454, %v712, %v711
        %v714 = vrot.slane %v618, 5
        %v715 = vsel %vm457, %v714, %v713
        %v716 = vrot.slane %v619, 4
        %v717 = vsel %vm460, %v716, %v715
        %v718 = vrot.slane %v620, 3
        %v719 = vsel %vm463, %v718, %v717
        %v720 = vrot.slane %v621, 2
        %v721 = vsel %vm466, %v720, %v719
        %v722 = vrot.slane %v622, 1
        %v723 = vsel %vm469, %v722, %v721
        %v726 = vsel %vm493, %v701, 0
        %728 = vmatpush.msra.mxu0 0.0
        %729 = vmatpush.msra.mxu0 0.0
        %730 = vmatpush.msra.mxu0 0.0
        %731 = vmatpush.msra.mxu0 0.0
        %732 = vmatpush.msra.mxu0 0.0
        %733 = vmatpush.msra.mxu0 0.0
        %734 = vmatpush.msra.mxu0 0.0
        %735 = vmatpush.msra.mxu0 0.0
        %736 = vmatpush.msra.mxu0 0.0
        %737 = vmatpush.msra.mxu0 0.0
        %738 = vmatpush.msra.mxu0 0.0
        %739 = vmatpush.msra.mxu0 0.0
        %740 = vmatpush.msra.mxu0 0.0
        %741 = vmatpush.msra.mxu0 0.0
        %742 = vmatpush.msra.mxu0 0.0
        %743 = vmatpush.msra.mxu0 %v723
        %744 = vmatmul.f32.gmra.mxu0 %v726
        %v745 = vpop.f32.mrf.mxu0
        %v746 = vadd.f32 0.0, %v745
        %747 = vdwg.mxu0
        %v749 = vrot.slane %v746, 1
        %v750 = vrot.slane %v746, 2
        %v751 = vrot.slane %v746, 3
        %v752 = vrot.slane %v746, 4
        %v753 = vrot.slane %v746, 5
        %v754 = vrot.slane %v746, 6
        %v755 = vrot.slane %v746, 7
        %763 = vst.msk [vmem:[%s417 + $0x1] sm:$0x1] %vm590, %v746
        %764 = vst.msk [vmem:[%s417 + $0x5] sm:$0x1] %vm590, %v749
        %765 = vst.msk [vmem:[%s417 + $0x9] sm:$0x1] %vm590, %v750
        %766 = vst.msk [vmem:[%s417 + $0xd] sm:$0x1] %vm590, %v751
        %767 = vst.msk [vmem:[%s417 + $0x11] sm:$0x1] %vm590, %v752
        %768 = vst.msk [vmem:[%s417 + $0x15] sm:$0x1] %vm590, %v753
        %769 = vst.msk [vmem:[%s417 + $0x19] sm:$0x1] %vm590, %v754
        %770 = vst.msk [vmem:[%s417 + $0x1d] sm:$0x1] %vm590, %v755
        %v771 = vld [vmem:[%s376 + $0x2] sm:$0x1]
        %v772 = vld [vmem:[%s376 + $0x6] sm:$0x1]
        %v773 = vld [vmem:[%s376 + $0xa] sm:$0x1]
        %v774 = vld [vmem:[%s376 + $0xe] sm:$0x1]
        %v775 = vld [vmem:[%s376 + $0x12] sm:$0x1]
        %v776 = vld [vmem:[%s376 + $0x16] sm:$0x1]
        %v777 = vld [vmem:[%s376 + $0x1a] sm:$0x1]
        %v778 = vld [vmem:[%s376 + $0x1e] sm:$0x1]
        %v779 = vld [vmem:[%s383 + $0x2] sm:$0x1]
        %v780 = vld [vmem:[%s383 + $0x6] sm:$0x1]
        %v781 = vld [vmem:[%s383 + $0xa] sm:$0x1]
        %v782 = vld [vmem:[%s383 + $0xe] sm:$0x1]
        %v783 = vld [vmem:[%s383 + $0x12] sm:$0x1]
        %v784 = vld [vmem:[%s383 + $0x16] sm:$0x1]
        %v785 = vld [vmem:[%s383 + $0x1a] sm:$0x1]
        %v786 = vld [vmem:[%s383 + $0x1e] sm:$0x1]
        %v787 = vld [vmem:[%s390 + $0x2] sm:$0x1]
        %v788 = vld [vmem:[%s390 + $0x6] sm:$0x1]
        %v789 = vld [vmem:[%s390 + $0xa] sm:$0x1]
        %v790 = vld [vmem:[%s390 + $0xe] sm:$0x1]
        %v791 = vld [vmem:[%s390 + $0x12] sm:$0x1]
        %v792 = vld [vmem:[%s390 + $0x16] sm:$0x1]
        %v793 = vld [vmem:[%s390 + $0x1a] sm:$0x1]
        %v794 = vld [vmem:[%s390 + $0x1e] sm:$0x1]
        %v803 = vrot.slane %v772, 7
        %v804 = vsel %vm451, %v803, %v771
        %v805 = vrot.slane %v773, 6
        %v806 = vsel %vm454, %v805, %v804
        %v807 = vrot.slane %v774, 5
        %v808 = vsel %vm457, %v807, %v806
        %v809 = vrot.slane %v775, 4
        %v810 = vsel %vm460, %v809, %v808
        %v811 = vrot.slane %v776, 3
        %v812 = vsel %vm463, %v811, %v810
        %v813 = vrot.slane %v777, 2
        %v814 = vsel %vm466, %v813, %v812
        %v815 = vrot.slane %v778, 1
        %v816 = vsel %vm469, %v815, %v814
        %v825 = vrot.slane %v780, 7
        %v826 = vsel %vm451, %v825, %v779
        %v827 = vrot.slane %v781, 6
        %v828 = vsel %vm454, %v827, %v826
        %v829 = vrot.slane %v782, 5
        %v830 = vsel %vm457, %v829, %v828
        %v831 = vrot.slane %v783, 4
        %v832 = vsel %vm460, %v831, %v830
        %v833 = vrot.slane %v784, 3
        %v834 = vsel %vm463, %v833, %v832
        %v835 = vrot.slane %v785, 2
        %v836 = vsel %vm466, %v835, %v834
        %v837 = vrot.slane %v786, 1
        %v838 = vsel %vm469, %v837, %v836
        %v839 = vsel %vm493, %v816, 0
        %v841 = vsel %vm493, %v838, 0
        %843 = vmatpush.xpose.msra.mxu0 0.0
        %844 = vmatpush.xpose.msra.mxu0 0.0
        %845 = vmatpush.xpose.msra.mxu0 0.0
        %846 = vmatpush.xpose.msra.mxu0 0.0
        %847 = vmatpush.xpose.msra.mxu0 0.0
        %848 = vmatpush.xpose.msra.mxu0 0.0
        %849 = vmatpush.xpose.msra.mxu0 0.0
        %850 = vmatpush.xpose.msra.mxu0 0.0
        %851 = vmatpush.xpose.msra.mxu0 0.0
        %852 = vmatpush.xpose.msra.mxu0 0.0
        %853 = vmatpush.xpose.msra.mxu0 0.0
        %854 = vmatpush.xpose.msra.mxu0 0.0
        %855 = vmatpush.xpose.msra.mxu0 0.0
        %856 = vmatpush.xpose.msra.mxu0 0.0
        %857 = vmatpush.xpose.msra.mxu0 0.0
        %858 = vmatpush.xpose.msra.mxu0 %v841
        %859 = vmatmul.f32.gmra.mxu0 %v839
        %v860 = vpop.f32.mrf.mxu0
        %v861 = vadd.f32 0.0, %v860
        %862 = vdwg.mxu0
        %v863 = vsel %vm493, %v861, -inf
        %864 = vmax.xlane.f32.xlu0 %v863
        %v865 = vpop.xlane.xlu0 %864
        %v866 = vsub.f32 %v861, %v865
        %v867 = vmul.f32 %v866, 1.442695
        %v868 = vpow.pop %v867
        %v869 = vsel %vm493, %v868, 0.0
        %870 = vadd.xlane.f32.xlu0 %v869
        %v871 = vpop.xlane.xlu0 %870
        %v872 = vrcp.pop %v871
        %v873 = vmul.f32 %v868, %v872
        %v882 = vrot.slane %v788, 7
        %v883 = vsel %vm451, %v882, %v787
        %v884 = vrot.slane %v789, 6
        %v885 = vsel %vm454, %v884, %v883
        %v886 = vrot.slane %v790, 5
        %v887 = vsel %vm457, %v886, %v885
        %v888 = vrot.slane %v791, 4
        %v889 = vsel %vm460, %v888, %v887
        %v890 = vrot.slane %v792, 3
        %v891 = vsel %vm463, %v890, %v889
        %v892 = vrot.slane %v793, 2
        %v893 = vsel %vm466, %v892, %v891
        %v894 = vrot.slane %v794, 1
        %v895 = vsel %vm469, %v894, %v893
        %v898 = vsel %vm493, %v873, 0
        %900 = vmatpush.msra.mxu0 0.0
        %901 = vmatpush.msra.mxu0 0.0
        %902 = vmatpush.msra.mxu0 0.0
        %903 = vmatpush.msra.mxu0 0.0
        %904 = vmatpush.msra.mxu0 0.0
        %905 = vmatpush.msra.mxu0 0.0
        %906 = vmatpush.msra.mxu0 0.0
        %907 = vmatpush.msra.mxu0 0.0
        %908 = vmatpush.msra.mxu0 0.0
        %909 = vmatpush.msra.mxu0 0.0
        %910 = vmatpush.msra.mxu0 0.0
        %911 = vmatpush.msra.mxu0 0.0
        %912 = vmatpush.msra.mxu0 0.0
        %913 = vmatpush.msra.mxu0 0.0
        %914 = vmatpush.msra.mxu0 0.0
        %915 = vmatpush.msra.mxu0 %v895
        %916 = vmatmul.f32.gmra.mxu0 %v898
        %v917 = vpop.f32.mrf.mxu0
        %v918 = vadd.f32 0.0, %v917
        %919 = vdwg.mxu0
        %v921 = vrot.slane %v918, 1
        %v922 = vrot.slane %v918, 2
        %v923 = vrot.slane %v918, 3
        %v924 = vrot.slane %v918, 4
        %v925 = vrot.slane %v918, 5
        %v926 = vrot.slane %v918, 6
        %v927 = vrot.slane %v918, 7
        %935 = vst.msk [vmem:[%s417 + $0x2] sm:$0x1] %vm590, %v918
        %936 = vst.msk [vmem:[%s417 + $0x6] sm:$0x1] %vm590, %v921
        %937 = vst.msk [vmem:[%s417 + $0xa] sm:$0x1] %vm590, %v922
        %938 = vst.msk [vmem:[%s417 + $0xe] sm:$0x1] %vm590, %v923
        %939 = vst.msk [vmem:[%s417 + $0x12] sm:$0x1] %vm590, %v924
        %940 = vst.msk [vmem:[%s417 + $0x16] sm:$0x1] %vm590, %v925
        %941 = vst.msk [vmem:[%s417 + $0x1a] sm:$0x1] %vm590, %v926
        %942 = vst.msk [vmem:[%s417 + $0x1e] sm:$0x1] %vm590, %v927
        %v943 = vld [vmem:[%s376 + $0x3] sm:$0x1]
        %v944 = vld [vmem:[%s376 + $0x7] sm:$0x1]
        %v945 = vld [vmem:[%s376 + $0xb] sm:$0x1]
        %v946 = vld [vmem:[%s376 + $0xf] sm:$0x1]
        %v947 = vld [vmem:[%s376 + $0x13] sm:$0x1]
        %v948 = vld [vmem:[%s376 + $0x17] sm:$0x1]
        %v949 = vld [vmem:[%s376 + $0x1b] sm:$0x1]
        %v950 = vld [vmem:[%s376 + $0x1f] sm:$0x1]
        %v951 = vld [vmem:[%s383 + $0x3] sm:$0x1]
        %v952 = vld [vmem:[%s383 + $0x7] sm:$0x1]
        %v953 = vld [vmem:[%s383 + $0xb] sm:$0x1]
        %v954 = vld [vmem:[%s383 + $0xf] sm:$0x1]
        %v955 = vld [vmem:[%s383 + $0x13] sm:$0x1]
        %v956 = vld [vmem:[%s383 + $0x17] sm:$0x1]
        %v957 = vld [vmem:[%s383 + $0x1b] sm:$0x1]
        %v958 = vld [vmem:[%s383 + $0x1f] sm:$0x1]
        %v959 = vld [vmem:[%s390 + $0x3] sm:$0x1]
        %v960 = vld [vmem:[%s390 + $0x7] sm:$0x1]
        %v961 = vld [vmem:[%s390 + $0xb] sm:$0x1]
        %v962 = vld [vmem:[%s390 + $0xf] sm:$0x1]
        %v963 = vld [vmem:[%s390 + $0x13] sm:$0x1]
        %v964 = vld [vmem:[%s390 + $0x17] sm:$0x1]
        %v965 = vld [vmem:[%s390 + $0x1b] sm:$0x1]
        %v966 = vld [vmem:[%s390 + $0x1f] sm:$0x1]
        %v975 = vrot.slane %v944, 7
        %v976 = vsel %vm451, %v975, %v943
        %v977 = vrot.slane %v945, 6
        %v978 = vsel %vm454, %v977, %v976
        %v979 = vrot.slane %v946, 5
        %v980 = vsel %vm457, %v979, %v978
        %v981 = vrot.slane %v947, 4
        %v982 = vsel %vm460, %v981, %v980
        %v983 = vrot.slane %v948, 3
        %v984 = vsel %vm463, %v983, %v982
        %v985 = vrot.slane %v949, 2
        %v986 = vsel %vm466, %v985, %v984
        %v987 = vrot.slane %v950, 1
        %v988 = vsel %vm469, %v987, %v986
        %v997 = vrot.slane %v952, 7
        %v998 = vsel %vm451, %v997, %v951
        %v999 = vrot.slane %v953, 6
        %v1000 = vsel %vm454, %v999, %v998
        %v1001 = vrot.slane %v954, 5
        %v1002 = vsel %vm457, %v1001, %v1000
        %v1003 = vrot.slane %v955, 4
        %v1004 = vsel %vm460, %v1003, %v1002
        %v1005 = vrot.slane %v956, 3
        %v1006 = vsel %vm463, %v1005, %v1004
        %v1007 = vrot.slane %v957, 2
        %v1008 = vsel %vm466, %v1007, %v1006
        %v1009 = vrot.slane %v958, 1
        %v1010 = vsel %vm469, %v1009, %v1008
        %v1011 = vsel %vm493, %v988, 0
        %v1013 = vsel %vm493, %v1010, 0
        %1015 = vmatpush.xpose.msra.mxu0 0.0
        %1016 = vmatpush.xpose.msra.mxu0 0.0
        %1017 = vmatpush.xpose.msra.mxu0 0.0
        %1018 = vmatpush.xpose.msra.mxu0 0.0
        %1019 = vmatpush.xpose.msra.mxu0 0.0
        %1020 = vmatpush.xpose.msra.mxu0 0.0
        %1021 = vmatpush.xpose.msra.mxu0 0.0
        %1022 = vmatpush.xpose.msra.mxu0 0.0
        %1023 = vmatpush.xpose.msra.mxu0 0.0
        %1024 = vmatpush.xpose.msra.mxu0 0.0
        %1025 = vmatpush.xpose.msra.mxu0 0.0
        %1026 = vmatpush.xpose.msra.mxu0 0.0
        %1027 = vmatpush.xpose.msra.mxu0 0.0
        %1028 = vmatpush.xpose.msra.mxu0 0.0
        %1029 = vmatpush.xpose.msra.mxu0 0.0
        %1030 = vmatpush.xpose.msra.mxu0 %v1013
        %1031 = vmatmul.f32.gmra.mxu0 %v1011
        %v1032 = vpop.f32.mrf.mxu0
        %v1033 = vadd.f32 0.0, %v1032
        %1034 = vdwg.mxu0
        %v1035 = vsel %vm493, %v1033, -inf
        %1036 = vmax.xlane.f32.xlu0 %v1035
        %v1037 = vpop.xlane.xlu0 %1036
        %v1038 = vsub.f32 %v1033, %v1037
        %v1039 = vmul.f32 %v1038, 1.442695
        %v1040 = vpow.pop %v1039
        %v1041 = vsel %vm493, %v1040, 0.0
        %1042 = vadd.xlane.f32.xlu0 %v1041
        %v1043 = vpop.xlane.xlu0 %1042
        %v1044 = vrcp.pop %v1043
        %v1045 = vmul.f32 %v1040, %v1044
        %v1054 = vrot.slane %v960, 7
        %v1055 = vsel %vm451, %v1054, %v959
        %v1056 = vrot.slane %v961, 6
        %v1057 = vsel %vm454, %v1056, %v1055
        %v1058 = vrot.slane %v962, 5
        %v1059 = vsel %vm457, %v1058, %v1057
        %v1060 = vrot.slane %v963, 4
        %v1061 = vsel %vm460, %v1060, %v1059
        %v1062 = vrot.slane %v964, 3
        %v1063 = vsel %vm463, %v1062, %v1061
        %v1064 = vrot.slane %v965, 2
        %v1065 = vsel %vm466, %v1064, %v1063
        %v1066 = vrot.slane %v966, 1
        %v1067 = vsel %vm469, %v1066, %v1065
        %v1070 = vsel %vm493, %v1045, 0
        %1072 = vmatpush.msra.mxu0 0.0
        %1073 = vmatpush.msra.mxu0 0.0
        %1074 = vmatpush.msra.mxu0 0.0
        %1075 = vmatpush.msra.mxu0 0.0
        %1076 = vmatpush.msra.mxu0 0.0
        %1077 = vmatpush.msra.mxu0 0.0
        %1078 = vmatpush.msra.mxu0 0.0
        %1079 = vmatpush.msra.mxu0 0.0
        %1080 = vmatpush.msra.mxu0 0.0
        %1081 = vmatpush.msra.mxu0 0.0
        %1082 = vmatpush.msra.mxu0 0.0
        %1083 = vmatpush.msra.mxu0 0.0
        %1084 = vmatpush.msra.mxu0 0.0
        %1085 = vmatpush.msra.mxu0 0.0
        %1086 = vmatpush.msra.mxu0 0.0
        %1087 = vmatpush.msra.mxu0 %v1067
        %1088 = vmatmul.f32.gmra.mxu0 %v1070
        %v1089 = vpop.f32.mrf.mxu0
        %v1090 = vadd.f32 0.0, %v1089
        %1091 = vdwg.mxu0
        %v1093 = vrot.slane %v1090, 1
        %v1094 = vrot.slane %v1090, 2
        %v1095 = vrot.slane %v1090, 3
        %v1096 = vrot.slane %v1090, 4
        %v1097 = vrot.slane %v1090, 5
        %v1098 = vrot.slane %v1090, 6
        %v1099 = vrot.slane %v1090, 7
        %1107 = vst.msk [vmem:[%s417 + $0x3] sm:$0x1] %vm590, %v1090
        %1108 = vst.msk [vmem:[%s417 + $0x7] sm:$0x1] %vm590, %v1093
        %1109 = vst.msk [vmem:[%s417 + $0xb] sm:$0x1] %vm590, %v1094
        %1110 = vst.msk [vmem:[%s417 + $0xf] sm:$0x1] %vm590, %v1095
        %1111 = vst.msk [vmem:[%s417 + $0x13] sm:$0x1] %vm590, %v1096
        %1112 = vst.msk [vmem:[%s417 + $0x17] sm:$0x1] %vm590, %v1097
        %1113 = vst.msk [vmem:[%s417 + $0x1b] sm:$0x1] %vm590, %v1098
        %1114 = vst.msk [vmem:[%s417 + $0x1f] sm:$0x1] %vm590, %v1099
        %s1115 = sand.u32 %s100, 1
        %s1116 = sand.u32 %s100, 1
        %s1117 = smul.addr %s1116, 32
        %s1118 = scalar_lea.vmem [#allocation5], %s1117
        // Predicated region
        $region156: #{transformer_encoder_layer.6} parent=142 // pred_check
          %p1119 = pneg %p110
        $region157: #{transformer_encoder_layer.6} parent=142 // pred_check_branch
          %1121 = sbr.rel (%p1119) target = $region159
        $region158: #{transformer_encoder_layer.6} parent=142 // pred_region
          %s1122 = smul.addr %s14, 4
          %s1123 = scalar_lea.vmem %s3, %s1122
          // Predicated region
          $region160: #{transformer_encoder_layer.6} parent=158 // pred_check
            _
          $region161: #{transformer_encoder_layer.6} parent=158 // pred_check_branch
            %1125 = sbr.rel (0) target = $region163
          $region162: #{transformer_encoder_layer.6} parent=158 // pred_region
            // Predicated region
            $region164: #{transformer_encoder_layer.6} parent=162 // pred_check
              _
            $region165: #{transformer_encoder_layer.6} parent=162 // pred_check_branch
              %1127 = sbr.rel target = $region167
            $region166: #{transformer_encoder_layer.6} parent=162 // pred_region
              // Predicated region
              $region179: #{transformer_encoder_layer.6} parent=166 // pred_check
                _
              $region180: #{transformer_encoder_layer.6} parent=166 // pred_check_branch
                %1157 = sbr.rel (0) target = $region182
              $region181: #{transformer_encoder_layer.6} parent=166 // pred_region
                loop: start=0, step=1, limit=1
                $region183: #{transformer_encoder_layer.6} parent=181 // loop_pre_header
                  _
                $region184: #{transformer_encoder_layer.6} parent=181 // loop_header
                  %s1159 = sphi 0, %s1163
                  %p1160 = scmp.ge.s32.totalorder %s1159, 1
                  %s1164 = sphi %s1118, %s1118
                  %s1165 = sphi %s1123, %s1123
                $region185: #{transformer_encoder_layer.6} parent=181 // loop_header_branch
                  %1162 = sbr.rel (%p1160) target = $region189
                $region186: #{transformer_encoder_layer.6} parent=181 // loop_body
                  _
                $region187: #{transformer_encoder_layer.6} parent=181 // loop_footer
                  %s1163 = sadd.s32 1, %s1159
                $region188: #{transformer_encoder_layer.6} parent=181 // loop_footer_branch
                  %1158 = sbr.rel target = $region184
                $region189: #{transformer_encoder_layer.6} parent=181 // loop_exit
                  _
                %s1167 = ssub.s32 16, 1
                loop: start=0, step=1, limit=1
                $region190: #{transformer_encoder_layer.6} parent=181 // loop_pre_header
                  _
                $region191: #{transformer_encoder_layer.6} parent=181 // loop_header
                  %s1169 = sphi 0, %s1173
                  %p1170 = scmp.ge.s32.totalorder %s1169, 1
                  %s1174 = sphi %s1118, %s1118
                  %s1175 = sphi %s1123, %s1123
                $region192: #{transformer_encoder_layer.6} parent=181 // loop_header_branch
                  %1172 = sbr.rel (%p1170) target = $region196
                $region193: #{transformer_encoder_layer.6} parent=181 // loop_body
                  %v1176 = vld [vmem:[%s1174] sm:%s1167]
                  %1177 = vst [vmem:[%s1175] sm:%s1167] %v1176
                  %v1178 = vld [vmem:[%s1174 + $0x4] sm:%s1167]
                  %1179 = vst [vmem:[%s1175 + $0x8] sm:%s1167] %v1178
                  %v1180 = vld [vmem:[%s1174 + $0x8] sm:%s1167]
                  %1181 = vst [vmem:[%s1175 + $0x10] sm:%s1167] %v1180
                  %v1182 = vld [vmem:[%s1174 + $0xc] sm:%s1167]
                  %1183 = vst [vmem:[%s1175 + $0x18] sm:%s1167] %v1182
                  %v1184 = vld [vmem:[%s1174 + $0x10] sm:%s1167]
                  %1185 = vst [vmem:[%s1175 + $0x20] sm:%s1167] %v1184
                  %v1186 = vld [vmem:[%s1174 + $0x14] sm:%s1167]
                  %1187 = vst [vmem:[%s1175 + $0x28] sm:%s1167] %v1186
                  %v1188 = vld [vmem:[%s1174 + $0x18] sm:%s1167]
                  %1189 = vst [vmem:[%s1175 + $0x30] sm:%s1167] %v1188
                  %v1190 = vld [vmem:[%s1174 + $0x1c] sm:%s1167]
                  %1191 = vst [vmem:[%s1175 + $0x38] sm:%s1167] %v1190
                $region194: #{transformer_encoder_layer.6} parent=181 // loop_footer
                  %s1173 = sadd.s32 1, %s1169
                $region195: #{transformer_encoder_layer.6} parent=181 // loop_footer_branch
                  %1168 = sbr.rel target = $region191
                $region196: #{transformer_encoder_layer.6} parent=181 // loop_exit
                  _
              $region182: #{transformer_encoder_layer.6} parent=166 // pred_fallthru
                _
            $region167: #{transformer_encoder_layer.6} parent=162 // pred_fallthru
              _
            // Predicated region
            $region168: #{transformer_encoder_layer.6} parent=162 // pred_check
              _
            $region169: #{transformer_encoder_layer.6} parent=162 // pred_check_branch
              %1129 = sbr.rel (0) target = $region171
            $region170: #{transformer_encoder_layer.6} parent=162 // pred_region
              %s1131 = ssub.s32 16, 1
              loop: start=0, step=1, limit=1
              $region172: #{transformer_encoder_layer.6} parent=170 // loop_pre_header
                _
              $region173: #{transformer_encoder_layer.6} parent=170 // loop_header
                %s1133 = sphi 0, %s1137
                %p1134 = scmp.ge.s32.totalorder %s1133, 1
                %s1138 = sphi %s1118, %s1118
                %s1139 = sphi %s1123, %s1123
              $region174: #{transformer_encoder_layer.6} parent=170 // loop_header_branch
                %1136 = sbr.rel (%p1134) target = $region178
              $region175: #{transformer_encoder_layer.6} parent=170 // loop_body
                %v1140 = vld [vmem:[%s1138] sm:%s1131]
                %1141 = vst [vmem:[%s1139] sm:%s1131] %v1140
                %v1142 = vld [vmem:[%s1138 + $0x4] sm:%s1131]
                %1143 = vst [vmem:[%s1139 + $0x8] sm:%s1131] %v1142
                %v1144 = vld [vmem:[%s1138 + $0x8] sm:%s1131]
                %1145 = vst [vmem:[%s1139 + $0x10] sm:%s1131] %v1144
                %v1146 = vld [vmem:[%s1138 + $0xc] sm:%s1131]
                %1147 = vst [vmem:[%s1139 + $0x18] sm:%s1131] %v1146
                %v1148 = vld [vmem:[%s1138 + $0x10] sm:%s1131]
                %1149 = vst [vmem:[%s1139 + $0x20] sm:%s1131] %v1148
                %v1150 = vld [vmem:[%s1138 + $0x14] sm:%s1131]
                %1151 = vst [vmem:[%s1139 + $0x28] sm:%s1131] %v1150
                %v1152 = vld [vmem:[%s1138 + $0x18] sm:%s1131]
                %1153 = vst [vmem:[%s1139 + $0x30] sm:%s1131] %v1152
                %v1154 = vld [vmem:[%s1138 + $0x1c] sm:%s1131]
                %1155 = vst [vmem:[%s1139 + $0x38] sm:%s1131] %v1154
              $region176: #{transformer_encoder_layer.6} parent=170 // loop_footer
                %s1137 = sadd.s32 1, %s1133
              $region177: #{transformer_encoder_layer.6} parent=170 // loop_footer_branch
                %1132 = sbr.rel target = $region173
              $region178: #{transformer_encoder_layer.6} parent=170 // loop_exit
                _
            $region171: #{transformer_encoder_layer.6} parent=162 // pred_fallthru
              _
          $region163: #{transformer_encoder_layer.6} parent=158 // pred_fallthru
            _
          %1192 = vnop
        $region159: #{transformer_encoder_layer.6} parent=142 // pred_fallthru
          _
      $region143: #{transformer_encoder_layer.6} parent=5 // pred_fallthru
        _
      %p1193 = scmp.le.s32.totalorder 2, %s9
      // Predicated region
      $region197: #{transformer_encoder_layer.6} parent=5 // pred_check
        %p1194 = pneg %p1193
      $region198: #{transformer_encoder_layer.6} parent=5 // pred_check_branch
        %1196 = sbr.rel (%p1194) target = $region200
      $region199: #{transformer_encoder_layer.6} parent=5 // pred_region
        %s1197 = ssub.s32 %s9, 2
        // Predicated region
        $region201: #{transformer_encoder_layer.6} parent=199 // pred_check
          %p1198 = pneg %p116
        $region202: #{transformer_encoder_layer.6} parent=199 // pred_check_branch
          %1200 = sbr.rel (%p1198) target = $region204
        $region203: #{transformer_encoder_layer.6} parent=199 // pred_region
          %s1201 = sand.u32 %s101, 1
          %s1202 = sand.u32 %s101, 1
          %s1203 = smul.addr %s1202, 32
          %s1204 = scalar_lea.vmem [#allocation5], %s1203
        $region204: #{transformer_encoder_layer.6} parent=199 // pred_fallthru
          _
      $region200: #{transformer_encoder_layer.6} parent=5 // pred_fallthru
        _
    $region6: #{transformer_encoder_layer.6} parent=1 // loop_footer
      %s13 = sadd.s32 1, %s9
    $region7: #{transformer_encoder_layer.6} parent=1 // loop_footer_branch
      %8 = sbr.rel target = $region3
    $region8: #{transformer_encoder_layer.6} parent=1 // loop_exit
      _

</llo_original>
